<compile_context>
chip_gen: v7x
topology: tpu7x:2x2x1
jax: 0.10.0
libtpu: 0.0.40
codegen_flags: <defaults>
</compile_context>

<pallas_src>
import numpy as np
import jax
import jax.numpy as jnp
from jax.experimental import pallas as pl
from jax.experimental.pallas import tpu as pltpu


# ---------------------------------------------------------------------------
# Host-side precomputed operators (plain numpy)
# ---------------------------------------------------------------------------
def _round_up(v, q):
    return -(-v // q) * q


def _adaptive_pool_bins(in_size, out_size):
    """0/1 bin-membership matrix and per-bin counts for nn.AdaptiveAvgPool."""
    ind = np.zeros((out_size, in_size), np.float32)
    cnt = np.zeros((out_size,), np.float32)
    for i in range(out_size):
        start = (i * in_size) // out_size
        end = -((-(i + 1) * in_size) // out_size)   # ceil((i+1)*in/out)
        ind[i, start:end] = 1.0
        cnt[i] = end - start
    return ind, cnt


def _adaptive_pool_matrix(in_size, out_size):
    ind, cnt = _adaptive_pool_bins(in_size, out_size)
    return ind / cnt[:, None]


def _bilinear_upsample_matrix(in_size, out_size):
    """U[o, i] for F.upsample(mode='bilinear', align_corners=False)."""
    U = np.zeros((out_size, in_size), np.float32)
    scale = in_size / out_size
    for o in range(out_size):
        src = max((o + 0.5) * scale - 0.5, 0.0)
        i0 = min(int(np.floor(src)), in_size - 1)
        i1 = min(i0 + 1, in_size - 1)
        lam = src - i0
        U[o, i0] += 1.0 - lam
        U[o, i1] += lam
    return U


def _build_packed_operators(H, W, sizes, lane_align=128):
    """Packed (all stages stacked) pooling / upsampling operators.

    Returns:
      P2     (SJP, H*W) f32  0/1 bin membership (bin SUMS, not averages)
      pscale (SJP, 1)   f32  1/bin_count per packed row (0 for padding rows)
      U2     (H*W, SJP) f32  bilinear upsample, stage blocks on packed columns
      offsets, counts        per-stage row offset (8-aligned) and s*s count
    """
    HW = H * W
    offsets, counts = [], []
    pos = 0
    for s in sizes:
        offsets.append(pos)
        counts.append(s * s)
        pos += _round_up(s * s, 8)          # sublane-aligned per-stage blocks
    SJP = max(_round_up(pos, lane_align), lane_align)

    P2 = np.zeros((SJP, HW), np.float32)
    pscale = np.zeros((SJP, 1), np.float32)
    U2 = np.zeros((HW, SJP), np.float32)
    for si, s in enumerate(sizes):
        off = offsets[si]
        ind_h, cnt_h = _adaptive_pool_bins(H, s)
        ind_w, cnt_w = _adaptive_pool_bins(W, s)
        Uh = _bilinear_upsample_matrix(s, H)
        Uw = _bilinear_upsample_matrix(s, W)
        P2[off:off + s * s, :] = np.kron(ind_h, ind_w)
        pscale[off:off + s * s, 0] = 1.0 / np.outer(cnt_h, cnt_w).reshape(-1)
        U2[:, off:off + s * s] = np.kron(Uh, Uw)
    return P2, pscale, U2, offsets, counts


def _fit_tile(dim, preferred, quanta):
    """Largest divisor of `dim` that is a multiple of some quantum in `quanta`
    and <= `preferred`; falls back to the full dim (always legal)."""
    for q in quanta:
        if dim % q != 0:
            continue
        t = min(preferred, dim)
        t -= t % q
        while t >= q:
            if dim % t == 0:
                return t
            t -= q
    return dim


def _vmem_limit_bytes(frac=0.8):
    """Generation-aware VMEM request (~80% of physical); None -> use default."""
    try:
        info = pltpu.get_tpu_info()
        cap = getattr(info, "vmem_capacity_bytes", None)
        if cap is None:
            cap = getattr(info, "vmem_size_bytes", None)
        if cap:
            return int(int(cap) * frac)
    except Exception:
        pass
    return None


# ---------------------------------------------------------------------------
# Pallas kernels
# ---------------------------------------------------------------------------
def _make_stage_kernel(offsets, counts):
    """Phase 1: grid = (N, HW/tp).  Pools all stages with one packed matmul per
    HW tile (f32 accumulator), then applies the per-stage 1x1 conv and that
    stage's slab of the final 1x1 conv on the tiny pooled data."""

    def kernel(x_ref, p2_ref, pscale_ref, ws_ref, wf_ref, zp_ref, pooled_acc):
        # x_ref     : (1, tp, C)     image features (C on the lane dim)
        # p2_ref    : (SJP, tp)      packed 0/1 pooling membership
        # pscale_ref: (SJP, 1) f32   1/bin_count per packed row
        # ws_ref    : (S, C, C)      stage 1x1 conv weights, [in, out]
        # wf_ref    : (S, C, outF)   per-stage slabs of the final 1x1 conv
        # zp_ref    : (1, SJP, outF) f32 projected pooled features (output)
        # pooled_acc: (SJP, C) f32   VMEM scratch accumulator
        hi = pl.program_id(1)

        @pl.when(hi == 0)
        def _init():
            pooled_acc[...] = jnp.zeros_like(pooled_acc)

        # Un-normalized bin sums (P2 entries are 0/1 -> exact in bf16);
        # the 1/bin_count scale is applied in f32 after accumulation.
        pooled_acc[...] += jnp.dot(p2_ref[...], x_ref[0],
                                   preferred_element_type=jnp.float32)

        @pl.when(hi == pl.num_programs(1) - 1)
        def _finalize():
            cdt = ws_ref.dtype
            pooled = pooled_acc[...] * pscale_ref[...]          # (SJP, C) f32
            zp_ref[...] = jnp.zeros_like(zp_ref)                # zero pad rows
            for si, (off, cnt) in enumerate(zip(offsets, counts)):
                p_s = pooled[off:off + cnt, :].astype(cdt)      # (s*s, C)
                z = jnp.dot(p_s, ws_ref[si],
                            preferred_element_type=jnp.float32)  # stage conv
                zproj = jnp.dot(z.astype(cdt), wf_ref[si],
                                preferred_element_type=jnp.float32)
                zp_ref[0, off:off + cnt, :] = zproj.astype(zp_ref.dtype)

    return kernel


def _head_kernel(x_ref, wx_ref, u2_ref, zp_ref, b_ref, o_ref):
    # grid = (N, HW/tm, outF/tf); no reduction axis: W_final_x stays resident.
    # x_ref : (1, tm, C)       image features tile
    # wx_ref: (C, tf)          x-slab of the final 1x1 conv weight
    # u2_ref: (tm, SJP)        packed bilinear upsample operator
    # zp_ref: (1, SJP, tf) f32 projected pooled stage features
    # b_ref : (1, tf)      f32 final conv bias
    # o_ref : (1, tm, tf)
    y = jnp.dot(x_ref[0], wx_ref[...], preferred_element_type=jnp.float32)
    y = y + jnp.dot(u2_ref[...], zp_ref[0].astype(u2_ref.dtype),
                    preferred_element_type=jnp.float32)
    y = y + b_ref[...].astype(jnp.float32)
    o_ref[0] = jnp.maximum(y, 0.0).astype(o_ref.dtype)


# ---------------------------------------------------------------------------
# Wrapper (PSPModule.forward)
# ---------------------------------------------------------------------------
def psp_module_forward(x, params, sizes=(1, 2, 3, 6),
                       compute_dtype=jnp.bfloat16, out_dtype=None,
                       channels_last=False,
                       tile_m=256, tile_f=512, tile_hw=1024):
    if out_dtype is None:
        out_dtype = compute_dtype

    if channels_last:
        N, H, W, C = x.shape
        x_flat = x.reshape(N, H * W, C).astype(compute_dtype)
    else:
        N, C, H, W = x.shape
        x_flat = jnp.transpose(x, (0, 2, 3, 1)).reshape(N, H * W, C)
        x_flat = x_flat.astype(compute_dtype)
    S = len(sizes)
    HW = H * W

    w_stage = jnp.asarray(params["w_stage"], jnp.float32)   # (S, C, C)  [out, in]
    w_final = jnp.asarray(params["w_final"], jnp.float32)   # ((S+1)C, outF) [in, out]
    b_final = jnp.asarray(params["b_final"], jnp.float32)   # (outF,)
    outF = w_final.shape[1]

    P2_np, pscale_np, U2_np, offsets, counts = _build_packed_operators(H, W, sizes)
    SJP = P2_np.shape[0]
    P2 = jnp.asarray(P2_np).astype(compute_dtype)            # 0/1, exact in bf16
    pscale = jnp.asarray(pscale_np)                          # f32
    U2 = jnp.asarray(U2_np).astype(compute_dtype)

    w_stage_t = jnp.transpose(w_stage, (0, 2, 1)).astype(compute_dtype)        # [in, out]
    w_final_stage = w_final[:S * C].reshape(S, C, outF).astype(compute_dtype)  # per-stage slabs
    w_final_x = w_final[S * C:].astype(compute_dtype)                          # (C, outF)
    bias = b_final.reshape(1, outF)                                            # f32

    vmem_cap = _vmem_limit_bytes()

    # ---- Phase 1: packed pooling + per-stage 1x1 conv + final-conv slab ----
    tp = _fit_tile(HW, tile_hw, quanta=(128,))
    zproj = pl.pallas_call(
        _make_stage_kernel(offsets, counts),
        out_shape=jax.ShapeDtypeStruct((N, SJP, outF), jnp.float32),
        grid=(N, HW // tp),
        in_specs=[
            pl.BlockSpec((1, tp, C),    lambda n, h: (n, h, 0)),
            pl.BlockSpec((SJP, tp),     lambda n, h: (0, h)),
            pl.BlockSpec((SJP, 1),      lambda n, h: (0, 0)),
            pl.BlockSpec((S, C, C),     lambda n, h: (0, 0, 0)),   # resident
            pl.BlockSpec((S, C, outF),  lambda n, h: (0, 0, 0)),   # resident
        ],
        out_specs=pl.BlockSpec((1, SJP, outF), lambda n, h: (n, 0, 0)),
        scratch_shapes=[pltpu.VMEM((SJP, C), jnp.float32)],
        compiler_params=pltpu.CompilerParams(
            dimension_semantics=("parallel", "arbitrary"),
            vmem_limit_bytes=vmem_cap),
    )(x_flat, P2, pscale, w_stage_t, w_final_stage)

    # ---- Phase 2: head  y = ReLU(x @ Wx + U2 @ zproj + b) ------------------
    tm = _fit_tile(HW, tile_m, quanta=(128, 16, 8))
    tf = _fit_tile(outF, tile_f, quanta=(128,))
    grid = (N, HW // tm, outF // tf)

    y = pl.pallas_call(
        _head_kernel,
        out_shape=jax.ShapeDtypeStruct((N, HW, outF), out_dtype),
        grid=grid,
        in_specs=[
            pl.BlockSpec((1, tm, C),    lambda n, mi, fi: (n, mi, 0)),
            pl.BlockSpec((C, tf),       lambda n, mi, fi: (0, fi)),   # resident
            pl.BlockSpec((tm, SJP),     lambda n, mi, fi: (mi, 0)),
            pl.BlockSpec((1, SJP, tf),  lambda n, mi, fi: (n, 0, fi)),
            pl.BlockSpec((1, tf),       lambda n, mi, fi: (0, fi)),
        ],
        out_specs=pl.BlockSpec((1, tm, tf), lambda n, mi, fi: (n, mi, fi)),
        compiler_params=pltpu.CompilerParams(
            dimension_semantics=("parallel", "parallel", "parallel"),
            vmem_limit_bytes=vmem_cap),
    )(x_flat, w_final_x, U2, zproj, bias)

    y = y.reshape(N, H, W, outF)
    if channels_last:
        return y
    return jnp.transpose(y, (0, 3, 1, 2))


# ---------------------------------------------------------------------------
# Pure-JAX reference following the PyTorch op order (pool -> conv -> upsample
# -> concat -> 1x1 conv + bias -> ReLU), f32 throughout.
# ---------------------------------------------------------------------------
def _reference(x_nchw, params, sizes=(1, 2, 3, 6)):
    N, C, H, W = x_nchw.shape
    feats = []
    for si, s in enumerate(sizes):
        Ph = jnp.asarray(_adaptive_pool_matrix(H, s))
        Pw = jnp.asarray(_adaptive_pool_matrix(W, s))
        Uh = jnp.asarray(_bilinear_upsample_matrix(s, H))
        Uw = jnp.asarray(_bilinear_upsample_matrix(s, W))
        pooled = jnp.einsum('ah,bw,nchw->ncab', Ph, Pw, x_nchw)
        z = jnp.einsum('dc,ncab->ndab', params["w_stage"][si], pooled)
        up = jnp.einsum('ha,wb,ndab->ndhw', Uh, Uw, z)
        feats.append(up)
    feats.append(x_nchw)
    cat = jnp.concatenate(feats, axis=1)                     # (N, (S+1)C, H, W)
    y = jnp.einsum('nkhw,kf->nfhw', cat, params["w_final"])
    y = y + params["b_final"][None, :, None, None]
    return jnp.maximum(y, 0.0)


# ---------------------------------------------------------------------------
if __name__ == "__main__":
    sizes = (1, 2, 3, 6)

    def make_inputs(key, N, C, H, W, outF):
        k1, k2, k3, k4 = jax.random.split(key, 4)
        params = {
            "w_stage": jax.random.normal(k1, (len(sizes), C, C), jnp.float32) * 0.1,
            "w_final": jax.random.normal(k2, ((len(sizes) + 1) * C, outF),
                                         jnp.float32) * 0.1,
            "b_final": jax.random.normal(k3, (outF,), jnp.float32) * 0.1,
        }
        x = jax.random.normal(k4, (N, C, H, W), jnp.float32)
        return x, params

    key = jax.random.PRNGKey(0)
    k_a, k_b = jax.random.split(key)

    # --- primary small shape (PSPModule with tiny dims) ---
    N, C, H, W, outF = 2, 4, 16, 16, 64
    x, params = make_inputs(k_a, N, C, H, W, outF)
    ref = jax.block_until_ready(_reference(x, params, sizes))

    out_f32 = jax.block_until_ready(
        psp_module_forward(x, params, sizes, compute_dtype=jnp.float32))
    assert out_f32.shape == (N, outF, H, W), out_f32.shape
    np.testing.assert_allclose(np.asarray(out_f32), np.asarray(ref),
                               atol=1e-3, rtol=1e-3)

    # bf16 compute + bf16 output (looser tolerance)
    out_bf16 = jax.block_until_ready(
        psp_module_forward(x, params, sizes, compute_dtype=jnp.bfloat16))
    np.testing.assert_allclose(np.asarray(out_bf16.astype(jnp.float32)),
                               np.asarray(ref), atol=5e-2, rtol=5e-2)

    # channels_last path (no NCHW<->NHWC transposes around the kernels)
    x_nhwc = jnp.transpose(x, (0, 2, 3, 1))
    out_nhwc = jax.block_until_ready(
        psp_module_forward(x_nhwc, params, sizes, compute_dtype=jnp.float32,
                           channels_last=True))
    np.testing.assert_allclose(np.asarray(out_nhwc),
                               np.asarray(jnp.transpose(ref, (0, 2, 3, 1))),
                               atol=1e-3, rtol=1e-3)

    # --- larger shape exercising multi-step HW / M tiling ---
    N2, C2, H2, W2, outF2 = 1, 256, 16, 16, 128
    x2, params2 = make_inputs(k_b, N2, C2, H2, W2, outF2)
    ref2 = jax.block_until_ready(_reference(x2, params2, sizes))
    out2 = jax.block_until_ready(
        psp_module_forward(x2, params2, sizes, compute_dtype=jnp.float32,
                           tile_m=128, tile_f=128, tile_hw=128))
    np.testing.assert_allclose(np.asarray(out2), np.asarray(ref2),
                               atol=1e-3, rtol=1e-3)

    print("KERNEL_OK")
</pallas_src>

<mosaic_0001>
module attributes {stable_mosaic.version = 11 : i64} {
  func.func @kernel(%arg0: i32, %arg1: i32, %arg2: memref<1x256x4xf32, #tpu.memory_space<vmem>>, %arg3: memref<128x256xf32, #tpu.memory_space<vmem>>, %arg4: memref<128x1xf32, #tpu.memory_space<vmem>>, %arg5: memref<4x4x4xf32, #tpu.memory_space<vmem>>, %arg6: memref<4x4x64xf32, #tpu.memory_space<vmem>>, %arg7: memref<1x128x64xf32, #tpu.memory_space<vmem>>, %arg8: memref<128x4xf32, #tpu.memory_space<vmem>>) attributes {dimension_semantics = [#tpu.dimension_semantics<parallel>, #tpu.dimension_semantics<arbitrary>], iteration_bounds = array<i64: 2, 1>, scalar_prefetch = 0 : i64, scratch_operands = 1 : i64, tpu.core_type = #tpu.core_type<tc>, window_params = [{transform_indices = @transform_0, window_bounds = array<i64: 1, 256, 4>}, {transform_indices = @transform_1, window_bounds = array<i64: 128, 256>}, {pipeline_mode = #tpu.pipeline_mode<synchronous>, transform_indices = @transform_2, window_bounds = array<i64: 128, 1>}, {pipeline_mode = #tpu.pipeline_mode<synchronous>, transform_indices = @transform_3, window_bounds = array<i64: 4, 4, 4>}, {pipeline_mode = #tpu.pipeline_mode<synchronous>, transform_indices = @transform_4, window_bounds = array<i64: 4, 4, 64>}, {transform_indices = @transform_5, window_bounds = array<i64: 1, 128, 64>}]} {
    %c0_i32 = arith.constant 0 : i32
    %0 = arith.cmpi eq, %arg1, %c0_i32 : i32
    %1 = arith.extui %0 : i1 to i32
    %c0_i32_0 = arith.constant 0 : i32
    %2 = arith.cmpi ne, %1, %c0_i32_0 : i32
    scf.if %2 {
      %cst_11 = arith.constant 0.000000e+00 : f32
      %13 = vector.broadcast %cst_11 : f32 to vector<128x4xf32>
      %c0_12 = arith.constant 0 : index
      %c0_13 = arith.constant 0 : index
      %14 = vector.load %arg8[%c0_12, %c0_13] : memref<128x4xf32, #tpu.memory_space<vmem>>, vector<128x4xf32>
      tpu.vector_store %arg8[%c0_12, %c0_13], %13 {strides = array<i32>} : memref<128x4xf32, #tpu.memory_space<vmem>>, vector<128x4xf32>,
    } else {
    }
    %c0 = arith.constant 0 : index
    %c0_1 = arith.constant 0 : index
    %3 = vector.load %arg8[%c0, %c0_1] : memref<128x4xf32, #tpu.memory_space<vmem>>, vector<128x4xf32>
    %c0_2 = arith.constant 0 : index
    %c0_3 = arith.constant 0 : index
    %4 = vector.load %arg3[%c0_2, %c0_3] : memref<128x256xf32, #tpu.memory_space<vmem>>, vector<128x256xf32>
    %c0_4 = arith.constant 0 : index
    %c0_5 = arith.constant 0 : index
    %c0_6 = arith.constant 0 : index
    %5 = vector.load %arg2[%c0_4, %c0_5, %c0_6] : memref<1x256x4xf32, #tpu.memory_space<vmem>>, vector<1x256x4xf32>
    %6 = vector.shape_cast %5 : vector<1x256x4xf32> to vector<256x4xf32>
    %cst = arith.constant dense<0.000000e+00> : vector<128x4xf32>
    %7 = tpu.matmul %4, %6, %cst {dimension_numbers = #tpu.dot_dimension_numbers<[1], [0], [0], [1], [0, 0, 1, 1], [], []>} : vector<128x256xf32>, vector<256x4xf32>, vector<128x4xf32> -> vector<128x4xf32>
    %8 = arith.addf %3, %7 : vector<128x4xf32>
    %c0_7 = arith.constant 0 : index
    %c0_8 = arith.constant 0 : index
    %9 = vector.load %arg8[%c0_7, %c0_8] : memref<128x4xf32, #tpu.memory_space<vmem>>, vector<128x4xf32>
    tpu.vector_store %arg8[%c0_7, %c0_8], %8 {strides = array<i32>} : memref<128x4xf32, #tpu.memory_space<vmem>>, vector<128x4xf32>,
    %c0_i32_9 = arith.constant 0 : i32
    %10 = arith.cmpi eq, %arg1, %c0_i32_9 : i32
    %11 = arith.extui %10 : i1 to i32
    %c0_i32_10 = arith.constant 0 : i32
    %12 = arith.cmpi ne, %11, %c0_i32_10 : i32
    scf.if %12 {
      %c0_11 = arith.constant 0 : index
      %c0_12 = arith.constant 0 : index
      %13 = vector.load %arg8[%c0_11, %c0_12] : memref<128x4xf32, #tpu.memory_space<vmem>>, vector<128x4xf32>
      %c0_13 = arith.constant 0 : index
      %c0_14 = arith.constant 0 : index
      %14 = vector.load %arg4[%c0_13, %c0_14] : memref<128x1xf32, #tpu.memory_space<vmem>>, vector<128x1xf32>
      %15 = vector.broadcast %14 : vector<128x1xf32> to vector<128x4xf32>
      %16 = arith.mulf %13, %15 : vector<128x4xf32>
      %cst_15 = arith.constant 0.000000e+00 : f32
      %17 = vector.broadcast %cst_15 : f32 to vector<1x128x64xf32>
      %c0_16 = arith.constant 0 : index
      %c0_17 = arith.constant 0 : index
      %c0_18 = arith.constant 0 : index
      %18 = vector.load %arg7[%c0_16, %c0_17, %c0_18] : memref<1x128x64xf32, #tpu.memory_space<vmem>>, vector<1x128x64xf32>
      tpu.vector_store %arg7[%c0_16, %c0_17, %c0_18], %17 {strides = array<i32>} : memref<1x128x64xf32, #tpu.memory_space<vmem>>, vector<1x128x64xf32>,
      %19 = vector.extract_strided_slice %16 {offsets = [0, 0], sizes = [1, 4], strides = [1, 1]} : vector<128x4xf32> to vector<1x4xf32>
      %c0_19 = arith.constant 0 : index
      %c0_20 = arith.constant 0 : index
      %c0_21 = arith.constant 0 : index
      %20 = vector.load %arg5[%c0_19, %c0_20, %c0_21] : memref<4x4x4xf32, #tpu.memory_space<vmem>>, vector<1x4x4xf32>
      %21 = vector.shape_cast %20 : vector<1x4x4xf32> to vector<4x4xf32>
      %cst_22 = arith.constant dense<0.000000e+00> : vector<1x4xf32>
      %22 = tpu.matmul %19, %21, %cst_22 {dimension_numbers = #tpu.dot_dimension_numbers<[1], [0], [0], [1], [0, 0, 1, 1], [], []>} : vector<1x4xf32>, vector<4x4xf32>, vector<1x4xf32> -> vector<1x4xf32>
      %c0_23 = arith.constant 0 : index
      %c0_24 = arith.constant 0 : index
      %c0_25 = arith.constant 0 : index
      %23 = vector.load %arg6[%c0_23, %c0_24, %c0_25] : memref<4x4x64xf32, #tpu.memory_space<vmem>>, vector<1x4x64xf32>
      %24 = vector.shape_cast %23 : vector<1x4x64xf32> to vector<4x64xf32>
      %cst_26 = arith.constant dense<0.000000e+00> : vector<1x64xf32>
      %25 = tpu.matmul %22, %24, %cst_26 {dimension_numbers = #tpu.dot_dimension_numbers<[1], [0], [0], [1], [0, 0, 1, 1], [], []>} : vector<1x4xf32>, vector<4x64xf32>, vector<1x64xf32> -> vector<1x64xf32>
      %c0_27 = arith.constant 0 : index
      %c0_28 = arith.constant 0 : index
      %c0_29 = arith.constant 0 : index
      %26 = vector.load %arg7[%c0_27, %c0_28, %c0_29] : memref<1x128x64xf32, #tpu.memory_space<vmem>>, vector<1x1x64xf32>
      %27 = vector.shape_cast %26 : vector<1x1x64xf32> to vector<1x64xf32>
      %28 = vector.shape_cast %25 : vector<1x64xf32> to vector<1x1x64xf32>
      tpu.vector_store %arg7[%c0_27, %c0_28, %c0_29], %28 {strides = array<i32>} : memref<1x128x64xf32, #tpu.memory_space<vmem>>, vector<1x1x64xf32>,
      %29 = vector.extract_strided_slice %16 {offsets = [8, 0], sizes = [4, 4], strides = [1, 1]} : vector<128x4xf32> to vector<4x4xf32>
      %c1 = arith.constant 1 : index
      %c0_30 = arith.constant 0 : index
      %c0_31 = arith.constant 0 : index
      %30 = vector.load %arg5[%c1, %c0_30, %c0_31] : memref<4x4x4xf32, #tpu.memory_space<vmem>>, vector<1x4x4xf32>
      %31 = vector.shape_cast %30 : vector<1x4x4xf32> to vector<4x4xf32>
      %cst_32 = arith.constant dense<0.000000e+00> : vector<4x4xf32>
      %32 = tpu.matmul %29, %31, %cst_32 {dimension_numbers = #tpu.dot_dimension_numbers<[1], [0], [0], [1], [0, 0, 1, 1], [], []>} : vector<4x4xf32>, vector<4x4xf32>, vector<4x4xf32> -> vector<4x4xf32>
      %c1_33 = arith.constant 1 : index
      %c0_34 = arith.constant 0 : index
      %c0_35 = arith.constant 0 : index
      %33 = vector.load %arg6[%c1_33, %c0_34, %c0_35] : memref<4x4x64xf32, #tpu.memory_space<vmem>>, vector<1x4x64xf32>
      %34 = vector.shape_cast %33 : vector<1x4x64xf32> to vector<4x64xf32>
      %cst_36 = arith.constant dense<0.000000e+00> : vector<4x64xf32>
      %35 = tpu.matmul %32, %34, %cst_36 {dimension_numbers = #tpu.dot_dimension_numbers<[1], [0], [0], [1], [0, 0, 1, 1], [], []>} : vector<4x4xf32>, vector<4x64xf32>, vector<4x64xf32> -> vector<4x64xf32>
      %c0_37 = arith.constant 0 : index
      %c8 = arith.constant 8 : index
      %c0_38 = arith.constant 0 : index
      %36 = vector.load %arg7[%c0_37, %c8, %c0_38] : memref<1x128x64xf32, #tpu.memory_space<vmem>>, vector<1x4x64xf32>
      %37 = vector.shape_cast %36 : vector<1x4x64xf32> to vector<4x64xf32>
      %38 = vector.shape_cast %35 : vector<4x64xf32> to vector<1x4x64xf32>
      tpu.vector_store %arg7[%c0_37, %c8, %c0_38], %38 {strides = array<i32>} : memref<1x128x64xf32, #tpu.memory_space<vmem>>, vector<1x4x64xf32>,
      %39 = vector.extract_strided_slice %16 {offsets = [16, 0], sizes = [9, 4], strides = [1, 1]} : vector<128x4xf32> to vector<9x4xf32>
      %c2 = arith.constant 2 : index
      %c0_39 = arith.constant 0 : index
      %c0_40 = arith.constant 0 : index
      %40 = vector.load %arg5[%c2, %c0_39, %c0_40] : memref<4x4x4xf32, #tpu.memory_space<vmem>>, vector<1x4x4xf32>
      %41 = vector.shape_cast %40 : vector<1x4x4xf32> to vector<4x4xf32>
      %cst_41 = arith.constant dense<0.000000e+00> : vector<9x4xf32>
      %42 = tpu.matmul %39, %41, %cst_41 {dimension_numbers = #tpu.dot_dimension_numbers<[1], [0], [0], [1], [0, 0, 1, 1], [], []>} : vector<9x4xf32>, vector<4x4xf32>, vector<9x4xf32> -> vector<9x4xf32>
      %c2_42 = arith.constant 2 : index
      %c0_43 = arith.constant 0 : index
      %c0_44 = arith.constant 0 : index
      %43 = vector.load %arg6[%c2_42, %c0_43, %c0_44] : memref<4x4x64xf32, #tpu.memory_space<vmem>>, vector<1x4x64xf32>
      %44 = vector.shape_cast %43 : vector<1x4x64xf32> to vector<4x64xf32>
      %cst_45 = arith.constant dense<0.000000e+00> : vector<9x64xf32>
      %45 = tpu.matmul %42, %44, %cst_45 {dimension_numbers = #tpu.dot_dimension_numbers<[1], [0], [0], [1], [0, 0, 1, 1], [], []>} : vector<9x4xf32>, vector<4x64xf32>, vector<9x64xf32> -> vector<9x64xf32>
      %c0_46 = arith.constant 0 : index
      %c16 = arith.constant 16 : index
      %c0_47 = arith.constant 0 : index
      %46 = vector.load %arg7[%c0_46, %c16, %c0_47] : memref<1x128x64xf32, #tpu.memory_space<vmem>>, vector<1x9x64xf32>
      %47 = vector.shape_cast %46 : vector<1x9x64xf32> to vector<9x64xf32>
      %48 = vector.shape_cast %45 : vector<9x64xf32> to vector<1x9x64xf32>
      tpu.vector_store %arg7[%c0_46, %c16, %c0_47], %48 {strides = array<i32>} : memref<1x128x64xf32, #tpu.memory_space<vmem>>, vector<1x9x64xf32>,
      %49 = vector.extract_strided_slice %16 {offsets = [32, 0], sizes = [36, 4], strides = [1, 1]} : vector<128x4xf32> to vector<36x4xf32>
      %c3 = arith.constant 3 : index
      %c0_48 = arith.constant 0 : index
      %c0_49 = arith.constant 0 : index
      %50 = vector.load %arg5[%c3, %c0_48, %c0_49] : memref<4x4x4xf32, #tpu.memory_space<vmem>>, vector<1x4x4xf32>
      %51 = vector.shape_cast %50 : vector<1x4x4xf32> to vector<4x4xf32>
      %cst_50 = arith.constant dense<0.000000e+00> : vector<36x4xf32>
      %52 = tpu.matmul %49, %51, %cst_50 {dimension_numbers = #tpu.dot_dimension_numbers<[1], [0], [0], [1], [0, 0, 1, 1], [], []>} : vector<36x4xf32>, vector<4x4xf32>, vector<36x4xf32> -> vector<36x4xf32>
      %c3_51 = arith.constant 3 : index
      %c0_52 = arith.constant 0 : index
      %c0_53 = arith.constant 0 : index
      %53 = vector.load %arg6[%c3_51, %c0_52, %c0_53] : memref<4x4x64xf32, #tpu.memory_space<vmem>>, vector<1x4x64xf32>
      %54 = vector.shape_cast %53 : vector<1x4x64xf32> to vector<4x64xf32>
      %cst_54 = arith.constant dense<0.000000e+00> : vector<36x64xf32>
      %55 = tpu.matmul %52, %54, %cst_54 {dimension_numbers = #tpu.dot_dimension_numbers<[1], [0], [0], [1], [0, 0, 1, 1], [], []>} : vector<36x4xf32>, vector<4x64xf32>, vector<36x64xf32> -> vector<36x64xf32>
      %c0_55 = arith.constant 0 : index
      %c32 = arith.constant 32 : index
      %c0_56 = arith.constant 0 : index
      %56 = vector.load %arg7[%c0_55, %c32, %c0_56] : memref<1x128x64xf32, #tpu.memory_space<vmem>>, vector<1x36x64xf32>
      %57 = vector.shape_cast %56 : vector<1x36x64xf32> to vector<36x64xf32>
      %58 = vector.shape_cast %55 : vector<36x64xf32> to vector<1x36x64xf32>
      tpu.vector_store %arg7[%c0_55, %c32, %c0_56], %58 {strides = array<i32>} : memref<1x128x64xf32, #tpu.memory_space<vmem>>, vector<1x36x64xf32>,
    } else {
    }
    return
  }
  func.func @transform_0(%arg0: i32, %arg1: i32) -> (i32, i32, i32) {
    %c0_i32 = arith.constant 0 : i32
    %c0_i32_0 = arith.constant 0 : i32
    return %arg0, %arg1, %c0_i32 : i32, i32, i32
  }
  func.func @transform_1(%arg0: i32, %arg1: i32) -> (i32, i32) {
    %c0_i32 = arith.constant 0 : i32
    %c0_i32_0 = arith.constant 0 : i32
    return %c0_i32, %arg1 : i32, i32
  }
  func.func @transform_2(%arg0: i32, %arg1: i32) -> (i32, i32) {
    %c0_i32 = arith.constant 0 : i32
    %c0_i32_0 = arith.constant 0 : i32
    %c0_i32_1 = arith.constant 0 : i32
    return %c0_i32, %c0_i32_0 : i32, i32
  }
  func.func @transform_3(%arg0: i32, %arg1: i32) -> (i32, i32, i32) {
    %c0_i32 = arith.constant 0 : i32
    %c0_i32_0 = arith.constant 0 : i32
    %c0_i32_1 = arith.constant 0 : i32
    %c0_i32_2 = arith.constant 0 : i32
    return %c0_i32, %c0_i32_0, %c0_i32_1 : i32, i32, i32
  }
  func.func @transform_4(%arg0: i32, %arg1: i32) -> (i32, i32, i32) {
    %c0_i32 = arith.constant 0 : i32
    %c0_i32_0 = arith.constant 0 : i32
    %c0_i32_1 = arith.constant 0 : i32
    %c0_i32_2 = arith.constant 0 : i32
    return %c0_i32, %c0_i32_0, %c0_i32_1 : i32, i32, i32
  }
  func.func @transform_5(%arg0: i32, %arg1: i32) -> (i32, i32, i32) {
    %c0_i32 = arith.constant 0 : i32
    %c0_i32_0 = arith.constant 0 : i32
    %c0_i32_1 = arith.constant 0 : i32
    return %arg0, %c0_i32, %c0_i32_0 : i32, i32, i32
  }
}

</mosaic_0001>

<llo_original>
// kernel: tpu_custom_call.1
$region0: #{tpu_custom_call.1}
  #allocation0 [shape = 'u32[]', space=smem, size = 0x4, offset = 0x4, fixed_abs, tag = 'smem constant byte address 0x4 - core index']
  #allocation1 [shape = 'u32[144,128]{1,0:T(1,128)}', space=vmem, size = 0x12000, scoped, tag = 'internal scratch']
  #allocation2 [shape = 'f32[128,4]{1,0:T(8,128)}', space=vmem, size = 0x10000, scoped, tag = 'scratch operand']
  %s0 = inlined_call_operand.vmem [shape: f32[2,256,4], index: 0, kind: input, shape index: {}]
  %s1 = inlined_call_operand.vmem [shape: f32[128,256], index: 1, kind: input, shape index: {}]
  %s2 = inlined_call_operand.vmem [shape: f32[128,1], index: 2, kind: input, shape index: {}]
  %s3 = inlined_call_operand.vmem [shape: f32[4,4,4], index: 3, kind: input, shape index: {}]
  %s4 = inlined_call_operand.vmem [shape: f32[4,4,64], index: 4, kind: input, shape index: {}]
  %s5 = inlined_call_operand.vmem [shape: f32[2,128,64], index: 5, kind: output, shape index: {}]
  %s6 = sld [smem:[#allocation0]]
  $region61: #{tpu_custom_call.1} parent=0
    _
  %s8 = ssub.s32 1, %s6
  %s9 = scalar_select 0, %s8, %s6
  loop: start=0, step=1, limit=4
  $region2: #{tpu_custom_call.1} parent=0 // loop_pre_header
    _
  $region3: #{tpu_custom_call.1} parent=0 // loop_header
    %s11 = sphi 0, %s15
    %p12 = scmp.ge.s32.totalorder %s11, 4
    %s18 = sphi 0, %s30
    %s19 = sphi 0, %s26
    %s20 = sphi 0, %s18
    %s21 = sphi 0, %s19
    %s22 = sphi 0, %s20
    %s23 = sphi 0, %s21
    %s35 = sphi 0, %s37
    %s38 = sphi 0, %s35
    %s39 = sphi 0, %s38
    %s55 = sphi 0, %s39
    %s61 = sphi 0, %s63
    %s64 = sphi 0, %s61
    %s65 = sphi 0, %s64
    %s81 = sphi 0, %s65
    %s85 = sphi 0, %s85
    %s87 = sphi 0, %s85
    %s88 = sphi 0, %s87
    %s102 = sphi 0, %s88
    %s106 = sphi 0, %s106
    %s108 = sphi 0, %s106
    %s109 = sphi 0, %s108
    %s123 = sphi 0, %s109
    %s127 = sphi 0, %s127
    %s129 = sphi 0, %s127
    %s130 = sphi 0, %s129
    %s144 = sphi 0, %s130
    %s150 = sphi 0, %s152
    %s153 = sphi 0, %s150
    %s154 = sphi 0, %s153
    %s170 = sphi 0, %s154
  $region4: #{tpu_custom_call.1} parent=0 // loop_header_branch
    %14 = sbr.rel (%p12) target = $region8
  $region5: #{tpu_custom_call.1} parent=0 // loop_body
    %s16 = ssub.s32 %s11, 1
    %s17 = ssub.s32 %s11, 2
    %s24 = sadd.s32 1, %s19
    %p25 = scmp.ge.s32.totalorder %s24, 1
    %s26 = scalar_select %p25, 0, %s24
    %s27 = sadd.s32 1, %s18
    %s28 = scalar_select %p25, %s27, %s18
    %p29 = scmp.ge.s32.totalorder %s28, 2
    %s30 = scalar_select %p29, 0, %s28
    %s31 = ssub.s32 %s18, %s30
    %s32 = ssub.s32 %s19, %s26
    %s33 = sor.u32 %s31, %s32
    %p34 = scmp.eq.s32.totalorder %s33, 0
    %s36 = sadd.s32 %s35, 1
    %s37 = scalar_select %p34, %s35, %s36
    %p40 = pneg %p34
    %p41 = scmp.eq.s32.totalorder %s11, 1
    %p42 = por %p40, %p41
    %p43 = scmp.ne.s32.totalorder %s35, %s38
    %p44 = scmp.eq.s32.totalorder %s11, 0
    %p45 = por %p43, %p44
    %p46 = scmp.ne.s32.totalorder %s35, %s38
    %p47 = scmp.eq.s32.totalorder %s16, 1
    %p48 = por %p46, %p47
    %p49 = scmp.ne.s32.totalorder %s38, %s39
    %p50 = scmp.eq.s32.totalorder %s16, 0
    %p51 = por %p49, %p50
    %p52 = scmp.ne.s32.totalorder %s38, %s39
    %p53 = scmp.eq.s32.totalorder %s17, 1
    %p54 = por %p52, %p53
    %p56 = scmp.ne.s32.totalorder %s39, %s55
    %p57 = scmp.eq.s32.totalorder %s17, 0
    %p58 = por %p56, %p57
    %s59 = ssub.s32 %s19, %s26
    %p60 = scmp.eq.s32.totalorder %s59, 0
    %s62 = sadd.s32 %s61, 1
    %s63 = scalar_select %p60, %s61, %s62
    %p66 = pneg %p60
    %p67 = scmp.eq.s32.totalorder %s11, 1
    %p68 = por %p66, %p67
    %p69 = scmp.ne.s32.totalorder %s61, %s64
    %p70 = scmp.eq.s32.totalorder %s11, 0
    %p71 = por %p69, %p70
    %p72 = scmp.ne.s32.totalorder %s61, %s64
    %p73 = scmp.eq.s32.totalorder %s16, 1
    %p74 = por %p72, %p73
    %p75 = scmp.ne.s32.totalorder %s64, %s65
    %p76 = scmp.eq.s32.totalorder %s16, 0
    %p77 = por %p75, %p76
    %p78 = scmp.ne.s32.totalorder %s64, %s65
    %p79 = scmp.eq.s32.totalorder %s17, 1
    %p80 = por %p78, %p79
    %p82 = scmp.ne.s32.totalorder %s65, %s81
    %p83 = scmp.eq.s32.totalorder %s17, 0
    %p84 = por %p82, %p83
    %s86 = sadd.s32 %s85, 1
    %p89 = scmp.eq.s32.totalorder %s11, 1
    %p90 = scmp.ne.s32.totalorder %s85, %s87
    %p91 = scmp.eq.s32.totalorder %s11, 0
    %p92 = por %p90, %p91
    %p93 = scmp.ne.s32.totalorder %s85, %s87
    %p94 = scmp.eq.s32.totalorder %s16, 1
    %p95 = por %p93, %p94
    %p96 = scmp.ne.s32.totalorder %s87, %s88
    %p97 = scmp.eq.s32.totalorder %s16, 0
    %p98 = por %p96, %p97
    %p99 = scmp.ne.s32.totalorder %s87, %s88
    %p100 = scmp.eq.s32.totalorder %s17, 1
    %p101 = por %p99, %p100
    %p103 = scmp.ne.s32.totalorder %s88, %s102
    %p104 = scmp.eq.s32.totalorder %s17, 0
    %p105 = por %p103, %p104
    %s107 = sadd.s32 %s106, 1
    %p110 = scmp.eq.s32.totalorder %s11, 1
    %p111 = scmp.ne.s32.totalorder %s106, %s108
    %p112 = scmp.eq.s32.totalorder %s11, 0
    %p113 = por %p111, %p112
    %p114 = scmp.ne.s32.totalorder %s106, %s108
    %p115 = scmp.eq.s32.totalorder %s16, 1
    %p116 = por %p114, %p115
    %p117 = scmp.ne.s32.totalorder %s108, %s109
    %p118 = scmp.eq.s32.totalorder %s16, 0
    %p119 = por %p117, %p118
    %p120 = scmp.ne.s32.totalorder %s108, %s109
    %p121 = scmp.eq.s32.totalorder %s17, 1
    %p122 = por %p120, %p121
    %p124 = scmp.ne.s32.totalorder %s109, %s123
    %p125 = scmp.eq.s32.totalorder %s17, 0
    %p126 = por %p124, %p125
    %s128 = sadd.s32 %s127, 1
    %p131 = scmp.eq.s32.totalorder %s11, 1
    %p132 = scmp.ne.s32.totalorder %s127, %s129
    %p133 = scmp.eq.s32.totalorder %s11, 0
    %p134 = por %p132, %p133
    %p135 = scmp.ne.s32.totalorder %s127, %s129
    %p136 = scmp.eq.s32.totalorder %s16, 1
    %p137 = por %p135, %p136
    %p138 = scmp.ne.s32.totalorder %s129, %s130
    %p139 = scmp.eq.s32.totalorder %s16, 0
    %p140 = por %p138, %p139
    %p141 = scmp.ne.s32.totalorder %s129, %s130
    %p142 = scmp.eq.s32.totalorder %s17, 1
    %p143 = por %p141, %p142
    %p145 = scmp.ne.s32.totalorder %s130, %s144
    %p146 = scmp.eq.s32.totalorder %s17, 0
    %p147 = por %p145, %p146
    %s148 = ssub.s32 %s18, %s30
    %p149 = scmp.eq.s32.totalorder %s148, 0
    %s151 = sadd.s32 %s150, 1
    %s152 = scalar_select %p149, %s150, %s151
    %p155 = pneg %p149
    %p156 = scmp.eq.s32.totalorder %s11, 1
    %p157 = por %p155, %p156
    %p158 = scmp.ne.s32.totalorder %s150, %s153
    %p159 = scmp.eq.s32.totalorder %s11, 0
    %p160 = por %p158, %p159
    %p161 = scmp.ne.s32.totalorder %s150, %s153
    %p162 = scmp.eq.s32.totalorder %s16, 1
    %p163 = por %p161, %p162
    %p164 = scmp.ne.s32.totalorder %s153, %s154
    %p165 = scmp.eq.s32.totalorder %s16, 0
    %p166 = por %p164, %p165
    %p167 = scmp.ne.s32.totalorder %s153, %s154
    %p168 = scmp.eq.s32.totalorder %s17, 1
    %p169 = por %p167, %p168
    %p171 = scmp.ne.s32.totalorder %s154, %s170
    %p172 = scmp.eq.s32.totalorder %s17, 0
    %p173 = por %p171, %p172
    %p174 = scmp.le.s32.totalorder 1, %s11
    %p175 = scmp.lt.s32.totalorder %s11, 3
    %p176 = pnand %p174, %p175
    %p177 = pneg %p176
    // Predicated region
    $region9: #{tpu_custom_call.1} parent=5 // pred_check
      _
    $region10: #{tpu_custom_call.1} parent=5 // pred_check_branch
      %179 = sbr.rel (%p176) target = $region12
    $region11: #{tpu_custom_call.1} parent=5 // pred_region
      %s180 = ssub.s32 %s11, 1
      // Predicated region
      $region13: #{tpu_custom_call.1} parent=11 // pred_check
        %p181 = pneg %p77
      $region14: #{tpu_custom_call.1} parent=11 // pred_check_branch
        %183 = sbr.rel (%p181) target = $region16
      $region15: #{tpu_custom_call.1} parent=11 // pred_region
        %s184 = smul.u32 2, %s21
        %p185 = scmp.lt.s32.totalorder %s184, 1
        %s186 = scalar_select %p185, %s184, 1
        %s187 = smul.addr %s186, 8
        %s188 = scalar_lea.vmem %s1, %s187
        %s189 = smul.u32 2, %s21
      $region16: #{tpu_custom_call.1} parent=11 // pred_fallthru
        _
      // Predicated region
      $region17: #{tpu_custom_call.1} parent=11 // pred_check
        %p190 = pneg %p98
      $region18: #{tpu_custom_call.1} parent=11 // pred_check_branch
        %192 = sbr.rel (%p190) target = $region20
      $region19: #{tpu_custom_call.1} parent=11 // pred_region
        _
      $region20: #{tpu_custom_call.1} parent=11 // pred_fallthru
        _
      // Predicated region
      $region21: #{tpu_custom_call.1} parent=11 // pred_check
        %p193 = pneg %p119
      $region22: #{tpu_custom_call.1} parent=11 // pred_check_branch
        %195 = sbr.rel (%p193) target = $region24
      $region23: #{tpu_custom_call.1} parent=11 // pred_region
        _
      $region24: #{tpu_custom_call.1} parent=11 // pred_fallthru
        _
      // Predicated region
      $region25: #{tpu_custom_call.1} parent=11 // pred_check
        %p196 = pneg %p140
      $region26: #{tpu_custom_call.1} parent=11 // pred_check_branch
        %198 = sbr.rel (%p196) target = $region28
      $region27: #{tpu_custom_call.1} parent=11 // pred_region
        _
      $region28: #{tpu_custom_call.1} parent=11 // pred_fallthru
        _
    $region12: #{tpu_custom_call.1} parent=5 // pred_fallthru
      _
    %p199 = scmp.lt.s32.totalorder %s11, 2
    // Predicated region
    $region29: #{tpu_custom_call.1} parent=5 // pred_check
      %p200 = pneg %p199
    $region30: #{tpu_custom_call.1} parent=5 // pred_check_branch
      %202 = sbr.rel (%p200) target = $region32
    $region31: #{tpu_custom_call.1} parent=5 // pred_region
      // Predicated region
      $region33: #{tpu_custom_call.1} parent=31 // pred_check
        %p203 = pneg %p45
      $region34: #{tpu_custom_call.1} parent=31 // pred_check_branch
        %205 = sbr.rel (%p203) target = $region36
      $region35: #{tpu_custom_call.1} parent=31 // pred_region
        %s206 = smul.u32 32, %s19
        %p207 = scmp.lt.s32.totalorder %s18, 1
        %s208 = scalar_select %p207, %s18, 1
        %p209 = scmp.lt.s32.totalorder %s206, 31
        %s210 = scalar_select %p209, %s206, 31
        %s211 = smul.addr %s208, 32
        %s212 = sadd.s32 %s210, %s211
        %s213 = smul.addr %s212, 8
        %s214 = scalar_lea.vmem %s0, %s213
        %s215 = smul.u32 32, %s19
      $region36: #{tpu_custom_call.1} parent=31 // pred_fallthru
        _
    $region32: #{tpu_custom_call.1} parent=5 // pred_fallthru
      _
    %p216 = scmp.le.s32.totalorder 1, %s11
    %p217 = scmp.lt.s32.totalorder %s11, 3
    %p218 = pnand %p216, %p217
    %p219 = pneg %p218
    // Predicated region
    $region37: #{tpu_custom_call.1} parent=5 // pred_check
      _
    $region38: #{tpu_custom_call.1} parent=5 // pred_check_branch
      %221 = sbr.rel (%p218) target = $region40
    $region39: #{tpu_custom_call.1} parent=5 // pred_region
      %s222 = ssub.s32 %s11, 1
      %s223 = smul.u32 32, %s21
      %p224 = scmp.lt.s32.totalorder %s20, 1
      %s225 = scalar_select %p224, %s20, 1
      %p226 = scmp.lt.s32.totalorder %s223, 31
      %s227 = scalar_select %p226, %s223, 31
      %s228 = smul.addr %s225, 32
      %s229 = sadd.s32 %s227, %s228
      %s230 = smul.addr %s229, 8
      %s231 = scalar_lea.vmem %s0, %s230
      %p232 = pneg %p51
      %p233 = pneg %p48
      %s234 = smul.u32 2, %s21
      %p235 = scmp.lt.s32.totalorder %s234, 1
      %s236 = scalar_select %p235, %s234, 1
      %s237 = smul.addr %s236, 8
      %s238 = scalar_lea.vmem %s1, %s237
      %p239 = pneg %p77
      %p240 = pneg %p74
      %p241 = pneg %p98
      %p242 = pneg %p95
      %p243 = pneg %p119
      %p244 = pneg %p116
      %p245 = pneg %p140
      %p246 = pneg %p137
      %p247 = pneg %p166
      %p248 = pneg %p163
      %p249 = scmp.lt.s32.totalorder %s20, 1
      %s250 = scalar_select %p249, %s20, 1
      %s251 = smul.addr %s250, 16
      %s252 = smul.addr %s251, 8
      %s253 = scalar_lea.vmem %s5, %s252
      %s254 = smul.u32 32, %s21
      %p255 = scmp.lt.s32.totalorder %s20, 1
      %s256 = scalar_select %p255, %s20, 1
      %p257 = scmp.lt.s32.totalorder %s254, 31
      %s258 = scalar_select %p257, %s254, 31
      %s259 = smul.addr %s256, 32
      %s260 = sadd.s32 %s258, %s259
      %s261 = smul.addr %s260, 8
      %s262 = scalar_lea.vmem %s0, %s261
      %s263 = smul.u32 32, %s21
      %s264 = smul.u32 2, %s21
      %p265 = scmp.lt.s32.totalorder %s264, 1
      %s266 = scalar_select %p265, %s264, 1
      %s267 = smul.addr %s266, 8
      %s268 = scalar_lea.vmem %s1, %s267
      %s269 = smul.u32 2, %s21
      %p270 = scmp.lt.s32.totalorder %s20, 1
      %s271 = scalar_select %p270, %s20, 1
      %s272 = smul.addr %s271, 16
      %s273 = smul.addr %s272, 8
      %s274 = scalar_lea.vmem %s5, %s273
      %p275 = scmp.eq.s32.totalorder %s21, 0
      // Predicated region
      $region41: #{tpu_custom_call.1} parent=39 // pred_check
        %p276 = pneg %p275
      $region42: #{tpu_custom_call.1} parent=39 // pred_check_branch
        %278 = sbr.rel (%p276) target = $region44
      $region43: #{tpu_custom_call.1} parent=39 // pred_region
        %vm279 = vcmask 31744
        %280 = vst.msk [vmem:[#allocation2] sm:$0xff] %vm279, 0.0
        %281 = vst.msk [vmem:[#allocation2 + $0x8] sm:$0xff] %vm279, 0.0
        %282 = vst.msk [vmem:[#allocation2 + $0x10] sm:$0xff] %vm279, 0.0
        %283 = vst.msk [vmem:[#allocation2 + $0x18] sm:$0xff] %vm279, 0.0
        %284 = vst.msk [vmem:[#allocation2 + $0x20] sm:$0xff] %vm279, 0.0
        %285 = vst.msk [vmem:[#allocation2 + $0x28] sm:$0xff] %vm279, 0.0
        %286 = vst.msk [vmem:[#allocation2 + $0x30] sm:$0xff] %vm279, 0.0
        %287 = vst.msk [vmem:[#allocation2 + $0x38] sm:$0xff] %vm279, 0.0
        %288 = vst.msk [vmem:[#allocation2 + $0x40] sm:$0xff] %vm279, 0.0
        %289 = vst.msk [vmem:[#allocation2 + $0x48] sm:$0xff] %vm279, 0.0
        %290 = vst.msk [vmem:[#allocation2 + $0x50] sm:$0xff] %vm279, 0.0
        %291 = vst.msk [vmem:[#allocation2 + $0x58] sm:$0xff] %vm279, 0.0
        %292 = vst.msk [vmem:[#allocation2 + $0x60] sm:$0xff] %vm279, 0.0
        %293 = vst.msk [vmem:[#allocation2 + $0x68] sm:$0xff] %vm279, 0.0
        %294 = vst.msk [vmem:[#allocation2 + $0x70] sm:$0xff] %vm279, 0.0
        %295 = vst.msk [vmem:[#allocation2 + $0x78] sm:$0xff] %vm279, 0.0
      $region44: #{tpu_custom_call.1} parent=39 // pred_fallthru
        _
      %v296 = vld [vmem:[#allocation2] sm:$0xff]
      %v297 = vld [vmem:[#allocation2 + $0x8] sm:$0xff]
      %v298 = vld [vmem:[#allocation2 + $0x10] sm:$0xff]
      %v299 = vld [vmem:[#allocation2 + $0x18] sm:$0xff]
      %v300 = vld [vmem:[#allocation2 + $0x20] sm:$0xff]
      %v301 = vld [vmem:[#allocation2 + $0x28] sm:$0xff]
      %v302 = vld [vmem:[#allocation2 + $0x30] sm:$0xff]
      %v303 = vld [vmem:[#allocation2 + $0x38] sm:$0xff]
      %v304 = vld [vmem:[#allocation2 + $0x40] sm:$0xff]
      %v305 = vld [vmem:[#allocation2 + $0x48] sm:$0xff]
      %v306 = vld [vmem:[#allocation2 + $0x50] sm:$0xff]
      %v307 = vld [vmem:[#allocation2 + $0x58] sm:$0xff]
      %v308 = vld [vmem:[#allocation2 + $0x60] sm:$0xff]
      %v309 = vld [vmem:[#allocation2 + $0x68] sm:$0xff]
      %v310 = vld [vmem:[#allocation2 + $0x70] sm:$0xff]
      %v311 = vld [vmem:[#allocation2 + $0x78] sm:$0xff]
      %v312 = vld [vmem:[%s268] sm:$0xff]
      %v313 = vld [vmem:[%s268 + $0x8] sm:$0xff]
      %v314 = vld [vmem:[%s268 + $0x10] sm:$0xff]
      %v315 = vld [vmem:[%s268 + $0x18] sm:$0xff]
      %v316 = vld [vmem:[%s268 + $0x20] sm:$0xff]
      %v317 = vld [vmem:[%s268 + $0x28] sm:$0xff]
      %v318 = vld [vmem:[%s268 + $0x30] sm:$0xff]
      %v319 = vld [vmem:[%s268 + $0x38] sm:$0xff]
      %v320 = vld [vmem:[%s268 + $0x40] sm:$0xff]
      %v321 = vld [vmem:[%s268 + $0x48] sm:$0xff]
      %v322 = vld [vmem:[%s268 + $0x50] sm:$0xff]
      %v323 = vld [vmem:[%s268 + $0x58] sm:$0xff]
      %v324 = vld [vmem:[%s268 + $0x60] sm:$0xff]
      %v325 = vld [vmem:[%s268 + $0x68] sm:$0xff]
      %v326 = vld [vmem:[%s268 + $0x70] sm:$0xff]
      %v327 = vld [vmem:[%s268 + $0x78] sm:$0xff]
      %v328 = vld [vmem:[%s268 + $0x80] sm:$0xff]
      %v329 = vld [vmem:[%s268 + $0x88] sm:$0xff]
      %v330 = vld [vmem:[%s268 + $0x90] sm:$0xff]
      %v331 = vld [vmem:[%s268 + $0x98] sm:$0xff]
      %v332 = vld [vmem:[%s268 + $0xa0] sm:$0xff]
      %v333 = vld [vmem:[%s268 + $0xa8] sm:$0xff]
      %v334 = vld [vmem:[%s268 + $0xb0] sm:$0xff]
      %v335 = vld [vmem:[%s268 + $0xb8] sm:$0xff]
      %v336 = vld [vmem:[%s268 + $0xc0] sm:$0xff]
      %v337 = vld [vmem:[%s268 + $0xc8] sm:$0xff]
      %v338 = vld [vmem:[%s268 + $0xd0] sm:$0xff]
      %v339 = vld [vmem:[%s268 + $0xd8] sm:$0xff]
      %v340 = vld [vmem:[%s268 + $0xe0] sm:$0xff]
      %v341 = vld [vmem:[%s268 + $0xe8] sm:$0xff]
      %v342 = vld [vmem:[%s268 + $0xf0] sm:$0xff]
      %v343 = vld [vmem:[%s268 + $0xf8] sm:$0xff]
      %v344 = vld [vmem:[%s262] sm:$0xff]
      %v345 = vld [vmem:[%s262 + $0x8] sm:$0xff]
      %v346 = vld [vmem:[%s262 + $0x10] sm:$0xff]
      %v347 = vld [vmem:[%s262 + $0x18] sm:$0xff]
      %v348 = vld [vmem:[%s262 + $0x20] sm:$0xff]
      %v349 = vld [vmem:[%s262 + $0x28] sm:$0xff]
      %v350 = vld [vmem:[%s262 + $0x30] sm:$0xff]
      %v351 = vld [vmem:[%s262 + $0x38] sm:$0xff]
      %v352 = vld [vmem:[%s262 + $0x40] sm:$0xff]
      %v353 = vld [vmem:[%s262 + $0x48] sm:$0xff]
      %v354 = vld [vmem:[%s262 + $0x50] sm:$0xff]
      %v355 = vld [vmem:[%s262 + $0x58] sm:$0xff]
      %v356 = vld [vmem:[%s262 + $0x60] sm:$0xff]
      %v357 = vld [vmem:[%s262 + $0x68] sm:$0xff]
      %v358 = vld [vmem:[%s262 + $0x70] sm:$0xff]
      %v359 = vld [vmem:[%s262 + $0x78] sm:$0xff]
      %v360 = vld [vmem:[%s262 + $0x80] sm:$0xff]
      %v361 = vld [vmem:[%s262 + $0x88] sm:$0xff]
      %v362 = vld [vmem:[%s262 + $0x90] sm:$0xff]
      %v363 = vld [vmem:[%s262 + $0x98] sm:$0xff]
      %v364 = vld [vmem:[%s262 + $0xa0] sm:$0xff]
      %v365 = vld [vmem:[%s262 + $0xa8] sm:$0xff]
      %v366 = vld [vmem:[%s262 + $0xb0] sm:$0xff]
      %v367 = vld [vmem:[%s262 + $0xb8] sm:$0xff]
      %v368 = vld [vmem:[%s262 + $0xc0] sm:$0xff]
      %v369 = vld [vmem:[%s262 + $0xc8] sm:$0xff]
      %v370 = vld [vmem:[%s262 + $0xd0] sm:$0xff]
      %v371 = vld [vmem:[%s262 + $0xd8] sm:$0xff]
      %v372 = vld [vmem:[%s262 + $0xe0] sm:$0xff]
      %v373 = vld [vmem:[%s262 + $0xe8] sm:$0xff]
      %v374 = vld [vmem:[%s262 + $0xf0] sm:$0xff]
      %v375 = vld [vmem:[%s262 + $0xf8] sm:$0xff]
      %376 = vmatprep.subr.mxu0 0.0
      %377 = vmatpush1.msra.mxu0 %v344
      %378 = vmatprep.subr.mxu0 0.0
      %379 = vmatpush1.msra.mxu0 %v345
      %380 = vmatprep.subr.mxu0 0.0
      %381 = vmatpush1.msra.mxu0 %v346
      %382 = vmatprep.subr.mxu0 0.0
      %383 = vmatpush1.msra.mxu0 %v347
      %384 = vmatprep.subr.mxu0 0.0
      %385 = vmatpush1.msra.mxu0 %v348
      %386 = vmatprep.subr.mxu0 0.0
      %387 = vmatpush1.msra.mxu0 %v349
      %388 = vmatprep.subr.mxu0 0.0
      %389 = vmatpush1.msra.mxu0 %v350
      %390 = vmatprep.subr.mxu0 0.0
      %391 = vmatpush1.msra.mxu0 %v351
      %392 = vmatprep.subr.mxu0 0.0
      %393 = vmatpush1.msra.mxu0 %v352
      %394 = vmatprep.subr.mxu0 0.0
      %395 = vmatpush1.msra.mxu0 %v353
      %396 = vmatprep.subr.mxu0 0.0
      %397 = vmatpush1.msra.mxu0 %v354
      %398 = vmatprep.subr.mxu0 0.0
      %399 = vmatpush1.msra.mxu0 %v355
      %400 = vmatprep.subr.mxu0 0.0
      %401 = vmatpush1.msra.mxu0 %v356
      %402 = vmatprep.subr.mxu0 0.0
      %403 = vmatpush1.msra.mxu0 %v357
      %404 = vmatprep.subr.mxu0 0.0
      %405 = vmatpush1.msra.mxu0 %v358
      %406 = vmatprep.subr.mxu0 0.0
      %407 = vmatpush1.msra.mxu0 %v359
      %408 = vmatprep.subr.mxu0 0.0
      %409 = vmatpush1.msra.mxu0 %v360
      %410 = vmatprep.subr.mxu0 0.0
      %411 = vmatpush1.msra.mxu0 %v361
      %412 = vmatprep.subr.mxu0 0.0
      %413 = vmatpush1.msra.mxu0 %v362
      %414 = vmatprep.subr.mxu0 0.0
      %415 = vmatpush1.msra.mxu0 %v363
      %416 = vmatprep.subr.mxu0 0.0
      %417 = vmatpush1.msra.mxu0 %v364
      %418 = vmatprep.subr.mxu0 0.0
      %419 = vmatpush1.msra.mxu0 %v365
      %420 = vmatprep.subr.mxu0 0.0
      %421 = vmatpush1.msra.mxu0 %v366
      %422 = vmatprep.subr.mxu0 0.0
      %423 = vmatpush1.msra.mxu0 %v367
      %424 = vmatprep.subr.mxu0 0.0
      %425 = vmatpush1.msra.mxu0 %v368
      %426 = vmatprep.subr.mxu0 0.0
      %427 = vmatpush1.msra.mxu0 %v369
      %428 = vmatprep.subr.mxu0 0.0
      %429 = vmatpush1.msra.mxu0 %v370
      %430 = vmatprep.subr.mxu0 0.0
      %431 = vmatpush1.msra.mxu0 %v371
      %432 = vmatprep.subr.mxu0 0.0
      %433 = vmatpush1.msra.mxu0 %v372
      %434 = vmatprep.subr.mxu0 0.0
      %435 = vmatpush1.msra.mxu0 %v373
      %436 = vmatprep.subr.mxu0 0.0
      %437 = vmatpush1.msra.mxu0 %v374
      %438 = vmatprep.subr.mxu0 0.0
      %439 = vmatpush1.msra.mxu0 %v375
      %440 = vmatprep.mubr.f32.mxu0 %v313
      %441 = vmatmul.mubr.f32.gmra.mrb[0].mxu0 %v312
      %v442 = vpop.f32.mrb[0].mxu0
      %v443 = vadd.f32 0.0, %v442
      %v444 = vpop.f32.mrb[0].mxu0
      %445 = vmatprep.mubr.f32.mxu0 %v315
      %446 = vmatmul.mubr.f32.gmra.mrb[0].mxu0 %v314
      %v447 = vpop.f32.mrb[0].mxu0
      %v448 = vadd.f32 0.0, %v447
      %v449 = vpop.f32.mrb[0].mxu0
      %450 = vmatprep.mubr.f32.mxu0 %v317
      %451 = vmatmul.mubr.f32.gmra.mrb[0].mxu0 %v316
      %v452 = vpop.f32.mrb[0].mxu0
      %v453 = vadd.f32 0.0, %v452
      %v454 = vpop.f32.mrb[0].mxu0
      %455 = vmatprep.mubr.f32.mxu0 %v319
      %456 = vmatmul.mubr.f32.gmra.mrb[0].mxu0 %v318
      %v457 = vpop.f32.mrb[0].mxu0
      %v458 = vadd.f32 0.0, %v457
      %v459 = vpop.f32.mrb[0].mxu0
      %460 = vmatprep.mubr.f32.mxu0 %v321
      %461 = vmatmul.mubr.f32.gmra.mrb[0].mxu0 %v320
      %v462 = vpop.f32.mrb[0].mxu0
      %v463 = vadd.f32 0.0, %v462
      %v464 = vpop.f32.mrb[0].mxu0
      %465 = vmatprep.mubr.f32.mxu0 %v323
      %466 = vmatmul.mubr.f32.gmra.mrb[0].mxu0 %v322
      %v467 = vpop.f32.mrb[0].mxu0
      %v468 = vadd.f32 0.0, %v467
      %v469 = vpop.f32.mrb[0].mxu0
      %470 = vmatprep.mubr.f32.mxu0 %v325
      %471 = vmatmul.mubr.f32.gmra.mrb[0].mxu0 %v324
      %v472 = vpop.f32.mrb[0].mxu0
      %v473 = vadd.f32 0.0, %v472
      %v474 = vpop.f32.mrb[0].mxu0
      %475 = vmatprep.mubr.f32.mxu0 %v327
      %476 = vmatmul.mubr.f32.gmra.mrb[0].mxu0 %v326
      %v477 = vpop.f32.mrb[0].mxu0
      %v478 = vadd.f32 0.0, %v477
      %v479 = vpop.f32.mrb[0].mxu0
      %480 = vmatprep.mubr.f32.mxu0 %v329
      %481 = vmatmul.mubr.f32.gmra.mrb[0].mxu0 %v328
      %v482 = vpop.f32.mrb[0].mxu0
      %v483 = vadd.f32 0.0, %v482
      %v484 = vpop.f32.mrb[0].mxu0
      %485 = vmatprep.mubr.f32.mxu0 %v331
      %486 = vmatmul.mubr.f32.gmra.mrb[0].mxu0 %v330
      %v487 = vpop.f32.mrb[0].mxu0
      %v488 = vadd.f32 0.0, %v487
      %v489 = vpop.f32.mrb[0].mxu0
      %490 = vmatprep.mubr.f32.mxu0 %v333
      %491 = vmatmul.mubr.f32.gmra.mrb[0].mxu0 %v332
      %v492 = vpop.f32.mrb[0].mxu0
      %v493 = vadd.f32 0.0, %v492
      %v494 = vpop.f32.mrb[0].mxu0
      %495 = vmatprep.mubr.f32.mxu0 %v335
      %496 = vmatmul.mubr.f32.gmra.mrb[0].mxu0 %v334
      %v497 = vpop.f32.mrb[0].mxu0
      %v498 = vadd.f32 0.0, %v497
      %v499 = vpop.f32.mrb[0].mxu0
      %500 = vmatprep.mubr.f32.mxu0 %v337
      %501 = vmatmul.mubr.f32.gmra.mrb[0].mxu0 %v336
      %v502 = vpop.f32.mrb[0].mxu0
      %v503 = vadd.f32 0.0, %v502
      %v504 = vpop.f32.mrb[0].mxu0
      %505 = vmatprep.mubr.f32.mxu0 %v339
      %506 = vmatmul.mubr.f32.gmra.mrb[0].mxu0 %v338
      %v507 = vpop.f32.mrb[0].mxu0
      %v508 = vadd.f32 0.0, %v507
      %v509 = vpop.f32.mrb[0].mxu0
      %510 = vmatprep.mubr.f32.mxu0 %v341
      %511 = vmatmul.mubr.f32.gmra.mrb[0].mxu0 %v340
      %v512 = vpop.f32.mrb[0].mxu0
      %v513 = vadd.f32 0.0, %v512
      %v514 = vpop.f32.mrb[0].mxu0
      %515 = vmatprep.mubr.f32.mxu0 %v343
      %516 = vmatmul.mubr.f32.gmra.mrb[0].mxu0 %v342
      %v517 = vpop.f32.mrb[0].mxu0
      %v518 = vadd.f32 0.0, %v517
      %v519 = vpop.f32.mrb[0].mxu0
      %520 = vdwg.mxu0
      %v521 = vadd.f32 %v296, %v443
      %v522 = vadd.f32 %v297, %v448
      %v523 = vadd.f32 %v298, %v453
      %v524 = vadd.f32 %v299, %v458
      %v525 = vadd.f32 %v300, %v463
      %v526 = vadd.f32 %v301, %v468
      %v527 = vadd.f32 %v302, %v473
      %v528 = vadd.f32 %v303, %v478
      %v529 = vadd.f32 %v304, %v483
      %v530 = vadd.f32 %v305, %v488
      %v531 = vadd.f32 %v306, %v493
      %v532 = vadd.f32 %v307, %v498
      %v533 = vadd.f32 %v308, %v503
      %v534 = vadd.f32 %v309, %v508
      %v535 = vadd.f32 %v310, %v513
      %v536 = vadd.f32 %v311, %v518
      %vm537 = vcmask 31744
      %538 = vst.msk [vmem:[#allocation2] sm:$0xff] %vm537, %v521
      %539 = vst.msk [vmem:[#allocation2 + $0x8] sm:$0xff] %vm537, %v522
      %540 = vst.msk [vmem:[#allocation2 + $0x10] sm:$0xff] %vm537, %v523
      %541 = vst.msk [vmem:[#allocation2 + $0x18] sm:$0xff] %vm537, %v524
      %542 = vst.msk [vmem:[#allocation2 + $0x20] sm:$0xff] %vm537, %v525
      %543 = vst.msk [vmem:[#allocation2 + $0x28] sm:$0xff] %vm537, %v526
      %544 = vst.msk [vmem:[#allocation2 + $0x30] sm:$0xff] %vm537, %v527
      %545 = vst.msk [vmem:[#allocation2 + $0x38] sm:$0xff] %vm537, %v528
      %546 = vst.msk [vmem:[#allocation2 + $0x40] sm:$0xff] %vm537, %v529
      %547 = vst.msk [vmem:[#allocation2 + $0x48] sm:$0xff] %vm537, %v530
      %548 = vst.msk [vmem:[#allocation2 + $0x50] sm:$0xff] %vm537, %v531
      %549 = vst.msk [vmem:[#allocation2 + $0x58] sm:$0xff] %vm537, %v532
      %550 = vst.msk [vmem:[#allocation2 + $0x60] sm:$0xff] %vm537, %v533
      %551 = vst.msk [vmem:[#allocation2 + $0x68] sm:$0xff] %vm537, %v534
      %552 = vst.msk [vmem:[#allocation2 + $0x70] sm:$0xff] %vm537, %v535
      %553 = vst.msk [vmem:[#allocation2 + $0x78] sm:$0xff] %vm537, %v536
      // Predicated region
      $region45: #{tpu_custom_call.1} parent=39 // pred_check
        %p554 = pneg %p275
      $region46: #{tpu_custom_call.1} parent=39 // pred_check_branch
        %556 = sbr.rel (%p554) target = $region48
      $region47: #{tpu_custom_call.1} parent=39 // pred_region
        %v557 = vld [vmem:[#allocation2] sm:$0xff]
        %v558 = vld [vmem:[#allocation2 + $0x8] sm:$0xff]
        %v559 = vld [vmem:[#allocation2 + $0x10] sm:$0xff]
        %v560 = vld [vmem:[#allocation2 + $0x18] sm:$0xff]
        %v561 = vld [vmem:[#allocation2 + $0x20] sm:$0xff]
        %v562 = vld [vmem:[#allocation2 + $0x28] sm:$0xff]
        %v563 = vld [vmem:[#allocation2 + $0x30] sm:$0xff]
        %v564 = vld [vmem:[#allocation2 + $0x38] sm:$0xff]
        %v565 = vld [vmem:[#allocation2 + $0x40] sm:$0xff]
        %v566 = vld [vmem:[%s2] sm:$0xff]
        %v567 = vld [vmem:[%s2 + $0x8] sm:$0xff]
        %v568 = vld [vmem:[%s2 + $0x10] sm:$0xff]
        %v569 = vld [vmem:[%s2 + $0x18] sm:$0xff]
        %v570 = vld [vmem:[%s2 + $0x20] sm:$0xff]
        %v571 = vld [vmem:[%s2 + $0x28] sm:$0xff]
        %v572 = vld [vmem:[%s2 + $0x30] sm:$0xff]
        %v573 = vld [vmem:[%s2 + $0x38] sm:$0xff]
        %v574 = vld [vmem:[%s2 + $0x40] sm:$0xff]
        %576 = vset.pattern.permute.xlu0 0
        %577 = vperm.xlu0 %576, %v566
        %v578 = vpop.permute.xlu0 %577
        %581 = vset.pattern.permute.xlu0 0
        %582 = vperm.xlu0 %581, %v567
        %v583 = vpop.permute.xlu0 %582
        %586 = vset.pattern.permute.xlu0 0
        %587 = vperm.xlu0 %586, %v568
        %v588 = vpop.permute.xlu0 %587
        %591 = vset.pattern.permute.xlu0 0
        %592 = vperm.xlu0 %591, %v569
        %v593 = vpop.permute.xlu0 %592
        %596 = vset.pattern.permute.xlu0 0
        %597 = vperm.xlu0 %596, %v570
        %v598 = vpop.permute.xlu0 %597
        %601 = vset.pattern.permute.xlu0 0
        %602 = vperm.xlu0 %601, %v571
        %v603 = vpop.permute.xlu0 %602
        %606 = vset.pattern.permute.xlu0 0
        %607 = vperm.xlu0 %606, %v572
        %v608 = vpop.permute.xlu0 %607
        %611 = vset.pattern.permute.xlu0 0
        %612 = vperm.xlu0 %611, %v573
        %v613 = vpop.permute.xlu0 %612
        %616 = vset.pattern.permute.xlu0 0
        %617 = vperm.xlu0 %616, %v574
        %v618 = vpop.permute.xlu0 %617
        %v620 = vmul.f32 %v557, %v578
        %v621 = vmul.f32 %v558, %v583
        %v622 = vmul.f32 %v559, %v588
        %v623 = vmul.f32 %v560, %v593
        %v624 = vmul.f32 %v561, %v598
        %v625 = vmul.f32 %v562, %v603
        %v626 = vmul.f32 %v563, %v608
        %v627 = vmul.f32 %v564, %v613
        %v628 = vmul.f32 %v565, %v618
        %vm629 = vcmask 523264
        %630 = vst.msk [vmem:[%s274] sm:$0xff] %vm629, 0.0
        %631 = vst.msk [vmem:[%s274 + $0x8] sm:$0xff] %vm629, 0.0
        %632 = vst.msk [vmem:[%s274 + $0x10] sm:$0xff] %vm629, 0.0
        %633 = vst.msk [vmem:[%s274 + $0x18] sm:$0xff] %vm629, 0.0
        %634 = vst.msk [vmem:[%s274 + $0x20] sm:$0xff] %vm629, 0.0
        %635 = vst.msk [vmem:[%s274 + $0x28] sm:$0xff] %vm629, 0.0
        %636 = vst.msk [vmem:[%s274 + $0x30] sm:$0xff] %vm629, 0.0
        %637 = vst.msk [vmem:[%s274 + $0x38] sm:$0xff] %vm629, 0.0
        %638 = vst.msk [vmem:[%s274 + $0x40] sm:$0xff] %vm629, 0.0
        %639 = vst.msk [vmem:[%s274 + $0x48] sm:$0xff] %vm629, 0.0
        %640 = vst.msk [vmem:[%s274 + $0x50] sm:$0xff] %vm629, 0.0
        %641 = vst.msk [vmem:[%s274 + $0x58] sm:$0xff] %vm629, 0.0
        %642 = vst.msk [vmem:[%s274 + $0x60] sm:$0xff] %vm629, 0.0
        %643 = vst.msk [vmem:[%s274 + $0x68] sm:$0xff] %vm629, 0.0
        %644 = vst.msk [vmem:[%s274 + $0x70] sm:$0xff] %vm629, 0.0
        %645 = vst.msk [vmem:[%s274 + $0x78] sm:$0xff] %vm629, 0.0
        %v646 = vld [vmem:[%s3] sm:$0xf]
        %v648 = vsel %vm537, %v620, 0
        %vm650 = vcmask 1043456
        %v652 = vsel %vm650, %v646, 0
        %654 = vmatprep.subr.mxu0 0.0
        %655 = vmatpush1.msra.mxu0 %v652
        %656 = vmatprep.subr.mxu0 0.0
        %657 = vmatpush1.msra.mxu0 0.0
        %658 = vmatprep.subr.mxu0 0.0
        %659 = vmatpush1.msra.mxu0 0.0
        %660 = vmatprep.subr.mxu0 0.0
        %661 = vmatpush1.msra.mxu0 0.0
        %662 = vmatprep.subr.mxu0 0.0
        %663 = vmatpush1.msra.mxu0 0.0
        %664 = vmatprep.subr.mxu0 0.0
        %665 = vmatpush1.msra.mxu0 0.0
        %666 = vmatprep.subr.mxu0 0.0
        %667 = vmatpush1.msra.mxu0 0.0
        %668 = vmatprep.subr.mxu0 0.0
        %669 = vmatpush1.msra.mxu0 0.0
        %670 = vmatprep.subr.mxu0 0.0
        %671 = vmatpush1.msra.mxu0 0.0
        %672 = vmatprep.subr.mxu0 0.0
        %673 = vmatpush1.msra.mxu0 0.0
        %674 = vmatprep.subr.mxu0 0.0
        %675 = vmatpush1.msra.mxu0 0.0
        %676 = vmatprep.subr.mxu0 0.0
        %677 = vmatpush1.msra.mxu0 0.0
        %678 = vmatprep.subr.mxu0 0.0
        %679 = vmatpush1.msra.mxu0 0.0
        %680 = vmatprep.subr.mxu0 0.0
        %681 = vmatpush1.msra.mxu0 0.0
        %682 = vmatprep.subr.mxu0 0.0
        %683 = vmatpush1.msra.mxu0 0.0
        %684 = vmatprep.subr.mxu0 0.0
        %685 = vmatpush1.msra.mxu0 0.0
        %686 = vmatprep.subr.mxu0 0.0
        %687 = vmatpush1.msra.mxu0 0.0
        %688 = vmatprep.subr.mxu0 0.0
        %689 = vmatpush1.msra.mxu0 0.0
        %690 = vmatprep.subr.mxu0 0.0
        %691 = vmatpush1.msra.mxu0 0.0
        %692 = vmatprep.subr.mxu0 0.0
        %693 = vmatpush1.msra.mxu0 0.0
        %694 = vmatprep.subr.mxu0 0.0
        %695 = vmatpush1.msra.mxu0 0.0
        %696 = vmatprep.subr.mxu0 0.0
        %697 = vmatpush1.msra.mxu0 0.0
        %698 = vmatprep.subr.mxu0 0.0
        %699 = vmatpush1.msra.mxu0 0.0
        %700 = vmatprep.subr.mxu0 0.0
        %701 = vmatpush1.msra.mxu0 0.0
        %702 = vmatprep.subr.mxu0 0.0
        %703 = vmatpush1.msra.mxu0 0.0
        %704 = vmatprep.subr.mxu0 0.0
        %705 = vmatpush1.msra.mxu0 0.0
        %706 = vmatprep.subr.mxu0 0.0
        %707 = vmatpush1.msra.mxu0 0.0
        %708 = vmatprep.subr.mxu0 0.0
        %709 = vmatpush1.msra.mxu0 0.0
        %710 = vmatprep.subr.mxu0 0.0
        %711 = vmatpush1.msra.mxu0 0.0
        %712 = vmatprep.subr.mxu0 0.0
        %713 = vmatpush1.msra.mxu0 0.0
        %714 = vmatprep.subr.mxu0 0.0
        %715 = vmatpush1.msra.mxu0 0.0
        %716 = vmatprep.subr.mxu0 0.0
        %717 = vmatpush1.msra.mxu0 0.0
        %718 = vmatprep.mubr.f32.mxu0 0.0
        %719 = vmatmul.mubr.f32.gmra.mrb[0].mxu0 %v648
        %v720 = vpop.f32.mrb[0].mxu0
        %v721 = vadd.f32 0.0, %v720
        %v722 = vpop.f32.mrb[0].mxu0
        %723 = vdwg.mxu0
        %v724 = vld [vmem:[%s4] sm:$0xf]
        %v726 = vsel %vm537, %v721, 0
        %v729 = vsel %vm650, %v724, 0
        %731 = vmatprep.subr.mxu0 0.0
        %732 = vmatpush1.msra.mxu0 %v729
        %733 = vmatprep.subr.mxu0 0.0
        %734 = vmatpush1.msra.mxu0 0.0
        %735 = vmatprep.subr.mxu0 0.0
        %736 = vmatpush1.msra.mxu0 0.0
        %737 = vmatprep.subr.mxu0 0.0
        %738 = vmatpush1.msra.mxu0 0.0
        %739 = vmatprep.subr.mxu0 0.0
        %740 = vmatpush1.msra.mxu0 0.0
        %741 = vmatprep.subr.mxu0 0.0
        %742 = vmatpush1.msra.mxu0 0.0
        %743 = vmatprep.subr.mxu0 0.0
        %744 = vmatpush1.msra.mxu0 0.0
        %745 = vmatprep.subr.mxu0 0.0
        %746 = vmatpush1.msra.mxu0 0.0
        %747 = vmatprep.subr.mxu0 0.0
        %748 = vmatpush1.msra.mxu0 0.0
        %749 = vmatprep.subr.mxu0 0.0
        %750 = vmatpush1.msra.mxu0 0.0
        %751 = vmatprep.subr.mxu0 0.0
        %752 = vmatpush1.msra.mxu0 0.0
        %753 = vmatprep.subr.mxu0 0.0
        %754 = vmatpush1.msra.mxu0 0.0
        %755 = vmatprep.subr.mxu0 0.0
        %756 = vmatpush1.msra.mxu0 0.0
        %757 = vmatprep.subr.mxu0 0.0
        %758 = vmatpush1.msra.mxu0 0.0
        %759 = vmatprep.subr.mxu0 0.0
        %760 = vmatpush1.msra.mxu0 0.0
        %761 = vmatprep.subr.mxu0 0.0
        %762 = vmatpush1.msra.mxu0 0.0
        %763 = vmatprep.subr.mxu0 0.0
        %764 = vmatpush1.msra.mxu0 0.0
        %765 = vmatprep.subr.mxu0 0.0
        %766 = vmatpush1.msra.mxu0 0.0
        %767 = vmatprep.subr.mxu0 0.0
        %768 = vmatpush1.msra.mxu0 0.0
        %769 = vmatprep.subr.mxu0 0.0
        %770 = vmatpush1.msra.mxu0 0.0
        %771 = vmatprep.subr.mxu0 0.0
        %772 = vmatpush1.msra.mxu0 0.0
        %773 = vmatprep.subr.mxu0 0.0
        %774 = vmatpush1.msra.mxu0 0.0
        %775 = vmatprep.subr.mxu0 0.0
        %776 = vmatpush1.msra.mxu0 0.0
        %777 = vmatprep.subr.mxu0 0.0
        %778 = vmatpush1.msra.mxu0 0.0
        %779 = vmatprep.subr.mxu0 0.0
        %780 = vmatpush1.msra.mxu0 0.0
        %781 = vmatprep.subr.mxu0 0.0
        %782 = vmatpush1.msra.mxu0 0.0
        %783 = vmatprep.subr.mxu0 0.0
        %784 = vmatpush1.msra.mxu0 0.0
        %785 = vmatprep.subr.mxu0 0.0
        %786 = vmatpush1.msra.mxu0 0.0
        %787 = vmatprep.subr.mxu0 0.0
        %788 = vmatpush1.msra.mxu0 0.0
        %789 = vmatprep.subr.mxu0 0.0
        %790 = vmatpush1.msra.mxu0 0.0
        %791 = vmatprep.subr.mxu0 0.0
        %792 = vmatpush1.msra.mxu0 0.0
        %793 = vmatprep.subr.mxu0 0.0
        %794 = vmatpush1.msra.mxu0 0.0
        %795 = vmatprep.mubr.f32.mxu0 0.0
        %796 = vmatmul.mubr.f32.gmra.mrb[0].mxu0 %v726
        %v797 = vpop.f32.mrb[0].mxu0
        %v798 = vadd.f32 0.0, %v797
        %v799 = vpop.f32.mrb[0].mxu0
        %800 = vdwg.mxu0
        %vm801 = vcmask 516096
        %802 = vst.msk [vmem:[%s274] sm:$0x1] %vm801, %v798
        %s803 = scalar_lea.vmem %s3, 4
        %v804 = vld [vmem:[%s803] sm:$0xf]
        %v806 = vsel %vm537, %v621, 0
        %v809 = vsel %vm650, %v804, 0
        %811 = vmatprep.subr.mxu0 0.0
        %812 = vmatpush1.msra.mxu0 %v809
        %813 = vmatprep.subr.mxu0 0.0
        %814 = vmatpush1.msra.mxu0 0.0
        %815 = vmatprep.subr.mxu0 0.0
        %816 = vmatpush1.msra.mxu0 0.0
        %817 = vmatprep.subr.mxu0 0.0
        %818 = vmatpush1.msra.mxu0 0.0
        %819 = vmatprep.subr.mxu0 0.0
        %820 = vmatpush1.msra.mxu0 0.0
        %821 = vmatprep.subr.mxu0 0.0
        %822 = vmatpush1.msra.mxu0 0.0
        %823 = vmatprep.subr.mxu0 0.0
        %824 = vmatpush1.msra.mxu0 0.0
        %825 = vmatprep.subr.mxu0 0.0
        %826 = vmatpush1.msra.mxu0 0.0
        %827 = vmatprep.subr.mxu0 0.0
        %828 = vmatpush1.msra.mxu0 0.0
        %829 = vmatprep.subr.mxu0 0.0
        %830 = vmatpush1.msra.mxu0 0.0
        %831 = vmatprep.subr.mxu0 0.0
        %832 = vmatpush1.msra.mxu0 0.0
        %833 = vmatprep.subr.mxu0 0.0
        %834 = vmatpush1.msra.mxu0 0.0
        %835 = vmatprep.subr.mxu0 0.0
        %836 = vmatpush1.msra.mxu0 0.0
        %837 = vmatprep.subr.mxu0 0.0
        %838 = vmatpush1.msra.mxu0 0.0
        %839 = vmatprep.subr.mxu0 0.0
        %840 = vmatpush1.msra.mxu0 0.0
        %841 = vmatprep.subr.mxu0 0.0
        %842 = vmatpush1.msra.mxu0 0.0
        %843 = vmatprep.subr.mxu0 0.0
        %844 = vmatpush1.msra.mxu0 0.0
        %845 = vmatprep.subr.mxu0 0.0
        %846 = vmatpush1.msra.mxu0 0.0
        %847 = vmatprep.subr.mxu0 0.0
        %848 = vmatpush1.msra.mxu0 0.0
        %849 = vmatprep.subr.mxu0 0.0
        %850 = vmatpush1.msra.mxu0 0.0
        %851 = vmatprep.subr.mxu0 0.0
        %852 = vmatpush1.msra.mxu0 0.0
        %853 = vmatprep.subr.mxu0 0.0
        %854 = vmatpush1.msra.mxu0 0.0
        %855 = vmatprep.subr.mxu0 0.0
        %856 = vmatpush1.msra.mxu0 0.0
        %857 = vmatprep.subr.mxu0 0.0
        %858 = vmatpush1.msra.mxu0 0.0
        %859 = vmatprep.subr.mxu0 0.0
        %860 = vmatpush1.msra.mxu0 0.0
        %861 = vmatprep.subr.mxu0 0.0
        %862 = vmatpush1.msra.mxu0 0.0
        %863 = vmatprep.subr.mxu0 0.0
        %864 = vmatpush1.msra.mxu0 0.0
        %865 = vmatprep.subr.mxu0 0.0
        %866 = vmatpush1.msra.mxu0 0.0
        %867 = vmatprep.subr.mxu0 0.0
        %868 = vmatpush1.msra.mxu0 0.0
        %869 = vmatprep.subr.mxu0 0.0
        %870 = vmatpush1.msra.mxu0 0.0
        %871 = vmatprep.subr.mxu0 0.0
        %872 = vmatpush1.msra.mxu0 0.0
        %873 = vmatprep.subr.mxu0 0.0
        %874 = vmatpush1.msra.mxu0 0.0
        %875 = vmatprep.mubr.f32.mxu0 0.0
        %876 = vmatmul.mubr.f32.gmra.mrb[0].mxu0 %v806
        %v877 = vpop.f32.mrb[0].mxu0
        %v878 = vadd.f32 0.0, %v877
        %v879 = vpop.f32.mrb[0].mxu0
        %880 = vdwg.mxu0
        %s881 = scalar_lea.vmem %s4, 4
        %v882 = vld [vmem:[%s881] sm:$0xf]
        %v884 = vsel %vm537, %v878, 0
        %v887 = vsel %vm650, %v882, 0
        %889 = vmatprep.subr.mxu0 0.0
        %890 = vmatpush1.msra.mxu0 %v887
        %891 = vmatprep.subr.mxu0 0.0
        %892 = vmatpush1.msra.mxu0 0.0
        %893 = vmatprep.subr.mxu0 0.0
        %894 = vmatpush1.msra.mxu0 0.0
        %895 = vmatprep.subr.mxu0 0.0
        %896 = vmatpush1.msra.mxu0 0.0
        %897 = vmatprep.subr.mxu0 0.0
        %898 = vmatpush1.msra.mxu0 0.0
        %899 = vmatprep.subr.mxu0 0.0
        %900 = vmatpush1.msra.mxu0 0.0
        %901 = vmatprep.subr.mxu0 0.0
        %902 = vmatpush1.msra.mxu0 0.0
        %903 = vmatprep.subr.mxu0 0.0
        %904 = vmatpush1.msra.mxu0 0.0
        %905 = vmatprep.subr.mxu0 0.0
        %906 = vmatpush1.msra.mxu0 0.0
        %907 = vmatprep.subr.mxu0 0.0
        %908 = vmatpush1.msra.mxu0 0.0
        %909 = vmatprep.subr.mxu0 0.0
        %910 = vmatpush1.msra.mxu0 0.0
        %911 = vmatprep.subr.mxu0 0.0
        %912 = vmatpush1.msra.mxu0 0.0
        %913 = vmatprep.subr.mxu0 0.0
        %914 = vmatpush1.msra.mxu0 0.0
        %915 = vmatprep.subr.mxu0 0.0
        %916 = vmatpush1.msra.mxu0 0.0
        %917 = vmatprep.subr.mxu0 0.0
        %918 = vmatpush1.msra.mxu0 0.0
        %919 = vmatprep.subr.mxu0 0.0
        %920 = vmatpush1.msra.mxu0 0.0
        %921 = vmatprep.subr.mxu0 0.0
        %922 = vmatpush1.msra.mxu0 0.0
        %923 = vmatprep.subr.mxu0 0.0
        %924 = vmatpush1.msra.mxu0 0.0
        %925 = vmatprep.subr.mxu0 0.0
        %926 = vmatpush1.msra.mxu0 0.0
        %927 = vmatprep.subr.mxu0 0.0
        %928 = vmatpush1.msra.mxu0 0.0
        %929 = vmatprep.subr.mxu0 0.0
        %930 = vmatpush1.msra.mxu0 0.0
        %931 = vmatprep.subr.mxu0 0.0
        %932 = vmatpush1.msra.mxu0 0.0
        %933 = vmatprep.subr.mxu0 0.0
        %934 = vmatpush1.msra.mxu0 0.0
        %935 = vmatprep.subr.mxu0 0.0
        %936 = vmatpush1.msra.mxu0 0.0
        %937 = vmatprep.subr.mxu0 0.0
        %938 = vmatpush1.msra.mxu0 0.0
        %939 = vmatprep.subr.mxu0 0.0
        %940 = vmatpush1.msra.mxu0 0.0
        %941 = vmatprep.subr.mxu0 0.0
        %942 = vmatpush1.msra.mxu0 0.0
        %943 = vmatprep.subr.mxu0 0.0
        %944 = vmatpush1.msra.mxu0 0.0
        %945 = vmatprep.subr.mxu0 0.0
        %946 = vmatpush1.msra.mxu0 0.0
        %947 = vmatprep.subr.mxu0 0.0
        %948 = vmatpush1.msra.mxu0 0.0
        %949 = vmatprep.subr.mxu0 0.0
        %950 = vmatpush1.msra.mxu0 0.0
        %951 = vmatprep.subr.mxu0 0.0
        %952 = vmatpush1.msra.mxu0 0.0
        %953 = vmatprep.mubr.f32.mxu0 0.0
        %954 = vmatmul.mubr.f32.gmra.mrb[0].mxu0 %v884
        %v955 = vpop.f32.mrb[0].mxu0
        %v956 = vadd.f32 0.0, %v955
        %v957 = vpop.f32.mrb[0].mxu0
        %958 = vdwg.mxu0
        %vm959 = vcmask 519168
        %960 = vst.msk [vmem:[%s274 + $0x8] sm:$0xf] %vm959, %v956
        %s961 = scalar_lea.vmem %s3, 8
        %v962 = vld [vmem:[%s961] sm:$0xf]
        %v964 = vsel %vm537, %v622, 0
        %v967 = vsel %vm537, %v623, 0
        %v970 = vsel %vm650, %v962, 0
        %972 = vmatprep.subr.mxu0 0.0
        %973 = vmatpush1.msra.mxu0 %v970
        %974 = vmatprep.subr.mxu0 0.0
        %975 = vmatpush1.msra.mxu0 0.0
        %976 = vmatprep.subr.mxu0 0.0
        %977 = vmatpush1.msra.mxu0 0.0
        %978 = vmatprep.subr.mxu0 0.0
        %979 = vmatpush1.msra.mxu0 0.0
        %980 = vmatprep.subr.mxu0 0.0
        %981 = vmatpush1.msra.mxu0 0.0
        %982 = vmatprep.subr.mxu0 0.0
        %983 = vmatpush1.msra.mxu0 0.0
        %984 = vmatprep.subr.mxu0 0.0
        %985 = vmatpush1.msra.mxu0 0.0
        %986 = vmatprep.subr.mxu0 0.0
        %987 = vmatpush1.msra.mxu0 0.0
        %988 = vmatprep.subr.mxu0 0.0
        %989 = vmatpush1.msra.mxu0 0.0
        %990 = vmatprep.subr.mxu0 0.0
        %991 = vmatpush1.msra.mxu0 0.0
        %992 = vmatprep.subr.mxu0 0.0
        %993 = vmatpush1.msra.mxu0 0.0
        %994 = vmatprep.subr.mxu0 0.0
        %995 = vmatpush1.msra.mxu0 0.0
        %996 = vmatprep.subr.mxu0 0.0
        %997 = vmatpush1.msra.mxu0 0.0
        %998 = vmatprep.subr.mxu0 0.0
        %999 = vmatpush1.msra.mxu0 0.0
        %1000 = vmatprep.subr.mxu0 0.0
        %1001 = vmatpush1.msra.mxu0 0.0
        %1002 = vmatprep.subr.mxu0 0.0
        %1003 = vmatpush1.msra.mxu0 0.0
        %1004 = vmatprep.subr.mxu0 0.0
        %1005 = vmatpush1.msra.mxu0 0.0
        %1006 = vmatprep.subr.mxu0 0.0
        %1007 = vmatpush1.msra.mxu0 0.0
        %1008 = vmatprep.subr.mxu0 0.0
        %1009 = vmatpush1.msra.mxu0 0.0
        %1010 = vmatprep.subr.mxu0 0.0
        %1011 = vmatpush1.msra.mxu0 0.0
        %1012 = vmatprep.subr.mxu0 0.0
        %1013 = vmatpush1.msra.mxu0 0.0
        %1014 = vmatprep.subr.mxu0 0.0
        %1015 = vmatpush1.msra.mxu0 0.0
        %1016 = vmatprep.subr.mxu0 0.0
        %1017 = vmatpush1.msra.mxu0 0.0
        %1018 = vmatprep.subr.mxu0 0.0
        %1019 = vmatpush1.msra.mxu0 0.0
        %1020 = vmatprep.subr.mxu0 0.0
        %1021 = vmatpush1.msra.mxu0 0.0
        %1022 = vmatprep.subr.mxu0 0.0
        %1023 = vmatpush1.msra.mxu0 0.0
        %1024 = vmatprep.subr.mxu0 0.0
        %1025 = vmatpush1.msra.mxu0 0.0
        %1026 = vmatprep.subr.mxu0 0.0
        %1027 = vmatpush1.msra.mxu0 0.0
        %1028 = vmatprep.subr.mxu0 0.0
        %1029 = vmatpush1.msra.mxu0 0.0
        %1030 = vmatprep.subr.mxu0 0.0
        %1031 = vmatpush1.msra.mxu0 0.0
        %1032 = vmatprep.subr.mxu0 0.0
        %1033 = vmatpush1.msra.mxu0 0.0
        %1034 = vmatprep.subr.mxu0 0.0
        %1035 = vmatpush1.msra.mxu0 0.0
        %1036 = vmatprep.mubr.f32.mxu0 0.0
        %1037 = vmatmul.mubr.f32.gmra.mrb[0].mxu0 %v964
        %v1038 = vpop.f32.mrb[0].mxu0
        %v1039 = vadd.f32 0.0, %v1038
        %v1040 = vpop.f32.mrb[0].mxu0
        %1041 = vmatprep.mubr.f32.mxu0 0.0
        %1042 = vmatmul.mubr.f32.gmra.mrb[0].mxu0 %v967
        %v1043 = vpop.f32.mrb[0].mxu0
        %v1044 = vadd.f32 0.0, %v1043
        %v1045 = vpop.f32.mrb[0].mxu0
        %1046 = vdwg.mxu0
        %s1047 = scalar_lea.vmem %s4, 8
        %v1048 = vld [vmem:[%s1047] sm:$0xf]
        %v1050 = vsel %vm537, %v1039, 0
        %v1053 = vsel %vm537, %v1044, 0
        %v1056 = vsel %vm650, %v1048, 0
        %1058 = vmatprep.subr.mxu0 0.0
        %1059 = vmatpush1.msra.mxu0 %v1056
        %1060 = vmatprep.subr.mxu0 0.0
        %1061 = vmatpush1.msra.mxu0 0.0
        %1062 = vmatprep.subr.mxu0 0.0
        %1063 = vmatpush1.msra.mxu0 0.0
        %1064 = vmatprep.subr.mxu0 0.0
        %1065 = vmatpush1.msra.mxu0 0.0
        %1066 = vmatprep.subr.mxu0 0.0
        %1067 = vmatpush1.msra.mxu0 0.0
        %1068 = vmatprep.subr.mxu0 0.0
        %1069 = vmatpush1.msra.mxu0 0.0
        %1070 = vmatprep.subr.mxu0 0.0
        %1071 = vmatpush1.msra.mxu0 0.0
        %1072 = vmatprep.subr.mxu0 0.0
        %1073 = vmatpush1.msra.mxu0 0.0
        %1074 = vmatprep.subr.mxu0 0.0
        %1075 = vmatpush1.msra.mxu0 0.0
        %1076 = vmatprep.subr.mxu0 0.0
        %1077 = vmatpush1.msra.mxu0 0.0
        %1078 = vmatprep.subr.mxu0 0.0
        %1079 = vmatpush1.msra.mxu0 0.0
        %1080 = vmatprep.subr.mxu0 0.0
        %1081 = vmatpush1.msra.mxu0 0.0
        %1082 = vmatprep.subr.mxu0 0.0
        %1083 = vmatpush1.msra.mxu0 0.0
        %1084 = vmatprep.subr.mxu0 0.0
        %1085 = vmatpush1.msra.mxu0 0.0
        %1086 = vmatprep.subr.mxu0 0.0
        %1087 = vmatpush1.msra.mxu0 0.0
        %1088 = vmatprep.subr.mxu0 0.0
        %1089 = vmatpush1.msra.mxu0 0.0
        %1090 = vmatprep.subr.mxu0 0.0
        %1091 = vmatpush1.msra.mxu0 0.0
        %1092 = vmatprep.subr.mxu0 0.0
        %1093 = vmatpush1.msra.mxu0 0.0
        %1094 = vmatprep.subr.mxu0 0.0
        %1095 = vmatpush1.msra.mxu0 0.0
        %1096 = vmatprep.subr.mxu0 0.0
        %1097 = vmatpush1.msra.mxu0 0.0
        %1098 = vmatprep.subr.mxu0 0.0
        %1099 = vmatpush1.msra.mxu0 0.0
        %1100 = vmatprep.subr.mxu0 0.0
        %1101 = vmatpush1.msra.mxu0 0.0
        %1102 = vmatprep.subr.mxu0 0.0
        %1103 = vmatpush1.msra.mxu0 0.0
        %1104 = vmatprep.subr.mxu0 0.0
        %1105 = vmatpush1.msra.mxu0 0.0
        %1106 = vmatprep.subr.mxu0 0.0
        %1107 = vmatpush1.msra.mxu0 0.0
        %1108 = vmatprep.subr.mxu0 0.0
        %1109 = vmatpush1.msra.mxu0 0.0
        %1110 = vmatprep.subr.mxu0 0.0
        %1111 = vmatpush1.msra.mxu0 0.0
        %1112 = vmatprep.subr.mxu0 0.0
        %1113 = vmatpush1.msra.mxu0 0.0
        %1114 = vmatprep.subr.mxu0 0.0
        %1115 = vmatpush1.msra.mxu0 0.0
        %1116 = vmatprep.subr.mxu0 0.0
        %1117 = vmatpush1.msra.mxu0 0.0
        %1118 = vmatprep.subr.mxu0 0.0
        %1119 = vmatpush1.msra.mxu0 0.0
        %1120 = vmatprep.subr.mxu0 0.0
        %1121 = vmatpush1.msra.mxu0 0.0
        %1122 = vmatprep.mubr.f32.mxu0 0.0
        %1123 = vmatmul.mubr.f32.gmra.mrb[0].mxu0 %v1050
        %v1124 = vpop.f32.mrb[0].mxu0
        %v1125 = vadd.f32 0.0, %v1124
        %v1126 = vpop.f32.mrb[0].mxu0
        %1127 = vmatprep.mubr.f32.mxu0 0.0
        %1128 = vmatmul.mubr.f32.gmra.mrb[0].mxu0 %v1053
        %v1129 = vpop.f32.mrb[0].mxu0
        %v1130 = vadd.f32 0.0, %v1129
        %v1131 = vpop.f32.mrb[0].mxu0
        %1132 = vdwg.mxu0
        %1133 = vst.msk [vmem:[%s274 + $0x10] sm:$0xff] %vm629, %v1125
        %1134 = vst.msk [vmem:[%s274 + $0x18] sm:$0x1] %vm801, %v1130
        %s1135 = scalar_lea.vmem %s3, 12
        %v1136 = vld [vmem:[%s1135] sm:$0xf]
        %v1138 = vsel %vm537, %v624, 0
        %v1141 = vsel %vm537, %v625, 0
        %v1144 = vsel %vm537, %v626, 0
        %v1147 = vsel %vm537, %v627, 0
        %v1150 = vsel %vm537, %v628, 0
        %v1153 = vsel %vm650, %v1136, 0
        %1155 = vmatprep.subr.mxu0 0.0
        %1156 = vmatpush1.msra.mxu0 %v1153
        %1157 = vmatprep.subr.mxu0 0.0
        %1158 = vmatpush1.msra.mxu0 0.0
        %1159 = vmatprep.subr.mxu0 0.0
        %1160 = vmatpush1.msra.mxu0 0.0
        %1161 = vmatprep.subr.mxu0 0.0
        %1162 = vmatpush1.msra.mxu0 0.0
        %1163 = vmatprep.subr.mxu0 0.0
        %1164 = vmatpush1.msra.mxu0 0.0
        %1165 = vmatprep.subr.mxu0 0.0
        %1166 = vmatpush1.msra.mxu0 0.0
        %1167 = vmatprep.subr.mxu0 0.0
        %1168 = vmatpush1.msra.mxu0 0.0
        %1169 = vmatprep.subr.mxu0 0.0
        %1170 = vmatpush1.msra.mxu0 0.0
        %1171 = vmatprep.subr.mxu0 0.0
        %1172 = vmatpush1.msra.mxu0 0.0
        %1173 = vmatprep.subr.mxu0 0.0
        %1174 = vmatpush1.msra.mxu0 0.0
        %1175 = vmatprep.subr.mxu0 0.0
        %1176 = vmatpush1.msra.mxu0 0.0
        %1177 = vmatprep.subr.mxu0 0.0
        %1178 = vmatpush1.msra.mxu0 0.0
        %1179 = vmatprep.subr.mxu0 0.0
        %1180 = vmatpush1.msra.mxu0 0.0
        %1181 = vmatprep.subr.mxu0 0.0
        %1182 = vmatpush1.msra.mxu0 0.0
        %1183 = vmatprep.subr.mxu0 0.0
        %1184 = vmatpush1.msra.mxu0 0.0
        %1185 = vmatprep.subr.mxu0 0.0
        %1186 = vmatpush1.msra.mxu0 0.0
        %1187 = vmatprep.subr.mxu0 0.0
        %1188 = vmatpush1.msra.mxu0 0.0
        %1189 = vmatprep.subr.mxu0 0.0
        %1190 = vmatpush1.msra.mxu0 0.0
        %1191 = vmatprep.subr.mxu0 0.0
        %1192 = vmatpush1.msra.mxu0 0.0
        %1193 = vmatprep.subr.mxu0 0.0
        %1194 = vmatpush1.msra.mxu0 0.0
        %1195 = vmatprep.subr.mxu0 0.0
        %1196 = vmatpush1.msra.mxu0 0.0
        %1197 = vmatprep.subr.mxu0 0.0
        %1198 = vmatpush1.msra.mxu0 0.0
        %1199 = vmatprep.subr.mxu0 0.0
        %1200 = vmatpush1.msra.mxu0 0.0
        %1201 = vmatprep.subr.mxu0 0.0
        %1202 = vmatpush1.msra.mxu0 0.0
        %1203 = vmatprep.subr.mxu0 0.0
        %1204 = vmatpush1.msra.mxu0 0.0
        %1205 = vmatprep.subr.mxu0 0.0
        %1206 = vmatpush1.msra.mxu0 0.0
        %1207 = vmatprep.subr.mxu0 0.0
        %1208 = vmatpush1.msra.mxu0 0.0
        %1209 = vmatprep.subr.mxu0 0.0
        %1210 = vmatpush1.msra.mxu0 0.0
        %1211 = vmatprep.subr.mxu0 0.0
        %1212 = vmatpush1.msra.mxu0 0.0
        %1213 = vmatprep.subr.mxu0 0.0
        %1214 = vmatpush1.msra.mxu0 0.0
        %1215 = vmatprep.subr.mxu0 0.0
        %1216 = vmatpush1.msra.mxu0 0.0
        %1217 = vmatprep.subr.mxu0 0.0
        %1218 = vmatpush1.msra.mxu0 0.0
        %1219 = vmatprep.mubr.f32.mxu0 0.0
        %1220 = vmatmul.mubr.f32.gmra.mrb[0].mxu0 %v1138
        %v1221 = vpop.f32.mrb[0].mxu0
        %v1222 = vadd.f32 0.0, %v1221
        %v1223 = vpop.f32.mrb[0].mxu0
        %1224 = vmatprep.mubr.f32.mxu0 0.0
        %1225 = vmatmul.mubr.f32.gmra.mrb[0].mxu0 %v1141
        %v1226 = vpop.f32.mrb[0].mxu0
        %v1227 = vadd.f32 0.0, %v1226
        %v1228 = vpop.f32.mrb[0].mxu0
        %1229 = vmatprep.mubr.f32.mxu0 0.0
        %1230 = vmatmul.mubr.f32.gmra.mrb[0].mxu0 %v1144
        %v1231 = vpop.f32.mrb[0].mxu0
        %v1232 = vadd.f32 0.0, %v1231
        %v1233 = vpop.f32.mrb[0].mxu0
        %1234 = vmatprep.mubr.f32.mxu0 0.0
        %1235 = vmatmul.mubr.f32.gmra.mrb[0].mxu0 %v1147
        %v1236 = vpop.f32.mrb[0].mxu0
        %v1237 = vadd.f32 0.0, %v1236
        %v1238 = vpop.f32.mrb[0].mxu0
        %1239 = vmatprep.mubr.f32.mxu0 0.0
        %1240 = vmatmul.mubr.f32.gmra.mrb[0].mxu0 %v1150
        %v1241 = vpop.f32.mrb[0].mxu0
        %v1242 = vadd.f32 0.0, %v1241
        %v1243 = vpop.f32.mrb[0].mxu0
        %1244 = vdwg.mxu0
        %s1245 = scalar_lea.vmem %s4, 12
        %v1246 = vld [vmem:[%s1245] sm:$0xf]
        %v1248 = vsel %vm537, %v1222, 0
        %v1251 = vsel %vm537, %v1227, 0
        %v1254 = vsel %vm537, %v1232, 0
        %v1257 = vsel %vm537, %v1237, 0
        %v1260 = vsel %vm537, %v1242, 0
        %v1263 = vsel %vm650, %v1246, 0
        %1265 = vmatprep.subr.mxu0 0.0
        %1266 = vmatpush1.msra.mxu0 %v1263
        %1267 = vmatprep.subr.mxu0 0.0
        %1268 = vmatpush1.msra.mxu0 0.0
        %1269 = vmatprep.subr.mxu0 0.0
        %1270 = vmatpush1.msra.mxu0 0.0
        %1271 = vmatprep.subr.mxu0 0.0
        %1272 = vmatpush1.msra.mxu0 0.0
        %1273 = vmatprep.subr.mxu0 0.0
        %1274 = vmatpush1.msra.mxu0 0.0
        %1275 = vmatprep.subr.mxu0 0.0
        %1276 = vmatpush1.msra.mxu0 0.0
        %1277 = vmatprep.subr.mxu0 0.0
        %1278 = vmatpush1.msra.mxu0 0.0
        %1279 = vmatprep.subr.mxu0 0.0
        %1280 = vmatpush1.msra.mxu0 0.0
        %1281 = vmatprep.subr.mxu0 0.0
        %1282 = vmatpush1.msra.mxu0 0.0
        %1283 = vmatprep.subr.mxu0 0.0
        %1284 = vmatpush1.msra.mxu0 0.0
        %1285 = vmatprep.subr.mxu0 0.0
        %1286 = vmatpush1.msra.mxu0 0.0
        %1287 = vmatprep.subr.mxu0 0.0
        %1288 = vmatpush1.msra.mxu0 0.0
        %1289 = vmatprep.subr.mxu0 0.0
        %1290 = vmatpush1.msra.mxu0 0.0
        %1291 = vmatprep.subr.mxu0 0.0
        %1292 = vmatpush1.msra.mxu0 0.0
        %1293 = vmatprep.subr.mxu0 0.0
        %1294 = vmatpush1.msra.mxu0 0.0
        %1295 = vmatprep.subr.mxu0 0.0
        %1296 = vmatpush1.msra.mxu0 0.0
        %1297 = vmatprep.subr.mxu0 0.0
        %1298 = vmatpush1.msra.mxu0 0.0
        %1299 = vmatprep.subr.mxu0 0.0
        %1300 = vmatpush1.msra.mxu0 0.0
        %1301 = vmatprep.subr.mxu0 0.0
        %1302 = vmatpush1.msra.mxu0 0.0
        %1303 = vmatprep.subr.mxu0 0.0
        %1304 = vmatpush1.msra.mxu0 0.0
        %1305 = vmatprep.subr.mxu0 0.0
        %1306 = vmatpush1.msra.mxu0 0.0
        %1307 = vmatprep.subr.mxu0 0.0
        %1308 = vmatpush1.msra.mxu0 0.0
        %1309 = vmatprep.subr.mxu0 0.0
        %1310 = vmatpush1.msra.mxu0 0.0
        %1311 = vmatprep.subr.mxu0 0.0
        %1312 = vmatpush1.msra.mxu0 0.0
        %1313 = vmatprep.subr.mxu0 0.0
        %1314 = vmatpush1.msra.mxu0 0.0
        %1315 = vmatprep.subr.mxu0 0.0
        %1316 = vmatpush1.msra.mxu0 0.0
        %1317 = vmatprep.subr.mxu0 0.0
        %1318 = vmatpush1.msra.mxu0 0.0
        %1319 = vmatprep.subr.mxu0 0.0
        %1320 = vmatpush1.msra.mxu0 0.0
        %1321 = vmatprep.subr.mxu0 0.0
        %1322 = vmatpush1.msra.mxu0 0.0
        %1323 = vmatprep.subr.mxu0 0.0
        %1324 = vmatpush1.msra.mxu0 0.0
        %1325 = vmatprep.subr.mxu0 0.0
        %1326 = vmatpush1.msra.mxu0 0.0
        %1327 = vmatprep.subr.mxu0 0.0
        %1328 = vmatpush1.msra.mxu0 0.0
        %1329 = vmatprep.mubr.f32.mxu0 0.0
        %1330 = vmatmul.mubr.f32.gmra.mrb[0].mxu0 %v1248
        %v1331 = vpop.f32.mrb[0].mxu0
        %v1332 = vadd.f32 0.0, %v1331
        %v1333 = vpop.f32.mrb[0].mxu0
        %1334 = vmatprep.mubr.f32.mxu0 0.0
        %1335 = vmatmul.mubr.f32.gmra.mrb[0].mxu0 %v1251
        %v1336 = vpop.f32.mrb[0].mxu0
        %v1337 = vadd.f32 0.0, %v1336
        %v1338 = vpop.f32.mrb[0].mxu0
        %1339 = vmatprep.mubr.f32.mxu0 0.0
        %1340 = vmatmul.mubr.f32.gmra.mrb[0].mxu0 %v1254
        %v1341 = vpop.f32.mrb[0].mxu0
        %v1342 = vadd.f32 0.0, %v1341
        %v1343 = vpop.f32.mrb[0].mxu0
        %1344 = vmatprep.mubr.f32.mxu0 0.0
        %1345 = vmatmul.mubr.f32.gmra.mrb[0].mxu0 %v1257
        %v1346 = vpop.f32.mrb[0].mxu0
        %v1347 = vadd.f32 0.0, %v1346
        %v1348 = vpop.f32.mrb[0].mxu0
        %1349 = vmatprep.mubr.f32.mxu0 0.0
        %1350 = vmatmul.mubr.f32.gmra.mrb[0].mxu0 %v1260
        %v1351 = vpop.f32.mrb[0].mxu0
        %v1352 = vadd.f32 0.0, %v1351
        %v1353 = vpop.f32.mrb[0].mxu0
        %1354 = vdwg.mxu0
        %1355 = vst.msk [vmem:[%s274 + $0x20] sm:$0xff] %vm629, %v1332
        %1356 = vst.msk [vmem:[%s274 + $0x28] sm:$0xff] %vm629, %v1337
        %1357 = vst.msk [vmem:[%s274 + $0x30] sm:$0xff] %vm629, %v1342
        %1358 = vst.msk [vmem:[%s274 + $0x38] sm:$0xff] %vm629, %v1347
        %1359 = vst.msk [vmem:[%s274 + $0x40] sm:$0xf] %vm959, %v1352
      $region48: #{tpu_custom_call.1} parent=39 // pred_fallthru
        _
      %p1360 = scmp.lt.s32.totalorder %s20, 1
      %s1361 = scalar_select %p1360, %s20, 1
      %s1362 = smul.addr %s1361, 16
      %s1363 = smul.addr %s1362, 8
      %s1364 = scalar_lea.vmem %s5, %s1363
      // Predicated region
      $region49: #{tpu_custom_call.1} parent=39 // pred_check
        %p1365 = pneg %p163
      $region50: #{tpu_custom_call.1} parent=39 // pred_check_branch
        %1367 = sbr.rel (%p1365) target = $region52
      $region51: #{tpu_custom_call.1} parent=39 // pred_region
        _
      $region52: #{tpu_custom_call.1} parent=39 // pred_fallthru
        _
    $region40: #{tpu_custom_call.1} parent=5 // pred_fallthru
      _
    %p1368 = scmp.le.s32.totalorder 2, %s11
    // Predicated region
    $region53: #{tpu_custom_call.1} parent=5 // pred_check
      %p1369 = pneg %p1368
    $region54: #{tpu_custom_call.1} parent=5 // pred_check_branch
      %1371 = sbr.rel (%p1369) target = $region56
    $region55: #{tpu_custom_call.1} parent=5 // pred_region
      %s1372 = ssub.s32 %s11, 2
      // Predicated region
      $region57: #{tpu_custom_call.1} parent=55 // pred_check
        %p1373 = pneg %p169
      $region58: #{tpu_custom_call.1} parent=55 // pred_check_branch
        %1375 = sbr.rel (%p1373) target = $region60
      $region59: #{tpu_custom_call.1} parent=55 // pred_region
        %p1376 = scmp.lt.s32.totalorder %s22, 1
        %s1377 = scalar_select %p1376, %s22, 1
        %s1378 = smul.addr %s1377, 16
        %s1379 = smul.addr %s1378, 8
        %s1380 = scalar_lea.vmem %s5, %s1379
      $region60: #{tpu_custom_call.1} parent=55 // pred_fallthru
        _
    $region56: #{tpu_custom_call.1} parent=5 // pred_fallthru
      _
  $region6: #{tpu_custom_call.1} parent=0 // loop_footer
    %s15 = sadd.s32 1, %s11
  $region7: #{tpu_custom_call.1} parent=0 // loop_footer_branch
    %10 = sbr.rel target = $region3
  $region8: #{tpu_custom_call.1} parent=0 // loop_exit
    _

</llo_original>
